<compile_context>
chip_gen: v7x
topology: tpu7x:2x2x1
jax: 0.10.0
libtpu: 0.0.40
codegen_flags: <defaults>
</compile_context>

<pallas_src>
import jax
import jax.numpy as jnp
from jax import lax
from jax.experimental import pallas as pl
from jax.experimental.pallas import tpu as pltpu


def _gru_seq_kernel(x_ref, h0_ref, wih_ref, whh_ref, bgi_ref, bhn_ref,
                    wout_ref, bout_ref, out_ref, hT_ref,
                    h_scr, gi_scr, hist_scr):
    TB, _ = x_ref.shape
    Bp, H = h_scr.shape
    T = TB // Bp
    H2 = 2 * H

    # ---- Prologue: all-step input projections in one GEMM (M = T*Bp rows) ----
    # b_gi already contains b_ih + [b_hh_r | b_hh_z | 0] (folded in the wrapper).
    gi_scr[...] = jnp.dot(x_ref[...], wih_ref[...],
                          preferred_element_type=jnp.float32) + bgi_ref[...]

    # Hidden state lives entirely in VMEM across the sequence.
    h_scr[...] = h0_ref[...].astype(jnp.float32)

    # Hoisted broadcast of the n-gate recurrent bias (emitted once, not T times).
    bhn = jnp.broadcast_to(bhn_ref[...], (Bp, H))

    def step(t, carry):
        row = pl.multiple_of(t * Bp, Bp)                      # 8-aligned row offset
        h = h_scr[...]                                        # (Bp, H) f32
        gi = gi_scr[pl.ds(row, Bp), :]                        # (Bp, 3H)

        # Recurrent projection: single stacked GEMM, no per-step bias broadcast.
        gh = jnp.dot(h, whh_ref[...], preferred_element_type=jnp.float32)

        # Fused sigmoid over the [r | z] slab (one EUP pass instead of two).
        rz = 1.0 / (1.0 + jnp.exp(-(gi[:, :H2] + gh[:, :H2])))
        r = rz[:, :H]
        z = rz[:, H:]
        n = jnp.tanh(gi[:, H2:] + r * (gh[:, H2:] + bhn))
        h_new = (1.0 - z) * n + z * h

        h_scr[...] = h_new
        hist_scr[pl.ds(row, Bp), :] = h_new                   # append to history
        return carry

    lax.fori_loop(0, T, step, 0, unroll=True)
    hT_ref[...] = h_scr[...].astype(hT_ref.dtype)

    # ---- Epilogue: output head + log-softmax over the whole (T*Bp, H) slab ----
    logits = jnp.dot(hist_scr[...], wout_ref[...],
                     preferred_element_type=jnp.float32) + bout_ref[...]
    m = jnp.max(logits, axis=1, keepdims=True)
    zc = logits - m
    lse = jnp.log(jnp.sum(jnp.exp(zc), axis=1, keepdims=True))
    out_ref[...] = (zc - lse).astype(out_ref.dtype)


def gru_forward_seq(x_seq, h0, w_ih, w_hh, b_ih, b_hh, w_out, b_out):
    """x_seq: (T, B, I); h0: (B, H); weights in PyTorch layout (out, in)."""
    T, B, I = x_seq.shape
    H = h0.shape[1]
    O = w_out.shape[0]
    H3 = 3 * H

    # Pad the batch to the f32 sublane granularity (8): tile-aligned reshapes,
    # no masked sublane stores, same wall time as B=2 on the vector units.
    Bp = max(8, ((B + 7) // 8) * 8)
    if Bp != B:
        x_seq = jnp.pad(x_seq, ((0, 0), (0, Bp - B), (0, 0)))
        h0 = jnp.pad(h0, ((0, Bp - B), (0, 0)))

    # Flatten in the wrapper (tile-aligned view since Bp % 8 == 0).
    x_flat = x_seq.reshape(T * Bp, I)

    # One-time weight/bias prep, amortized over the whole sequence.
    w_ih_t = w_ih.T                                            # (I, 3H)
    w_hh_t = w_hh.T                                            # (H, 3H)
    w_out_t = w_out.T                                          # (H, O)
    # Fold the r/z parts of b_hh into the gi bias; keep only the n-gate term
    # (it is multiplied by r, so it must stay with the recurrent projection).
    b_gi = (b_ih + jnp.concatenate(
        [b_hh[:2 * H], jnp.zeros((H,), b_hh.dtype)])).reshape(1, H3)
    b_hn = b_hh[2 * H:].reshape(1, H)
    b_out2 = b_out.reshape(1, O)

    full = lambda shape: pl.BlockSpec(shape, lambda: (0,) * len(shape))

    out_flat, h_final = pl.pallas_call(
        _gru_seq_kernel,
        out_shape=(
            jax.ShapeDtypeStruct((T * Bp, O), jnp.float32),    # log-softmax per step
            jax.ShapeDtypeStruct((Bp, H), jnp.float32),        # final hidden
        ),
        in_specs=[full(a.shape) for a in
                  (x_flat, h0, w_ih_t, w_hh_t, b_gi, b_hn, w_out_t, b_out2)],
        out_specs=(full((T * Bp, O)), full((Bp, H))),
        scratch_shapes=[
            pltpu.VMEM((Bp, H), jnp.float32),                  # carried hidden
            pltpu.VMEM((T * Bp, H3), jnp.float32),             # precomputed gi
            pltpu.VMEM((T * Bp, H), jnp.float32),              # hidden history
        ],
    )(x_flat, h0, w_ih_t, w_hh_t, b_gi, b_hn, w_out_t, b_out2)

    out_seq = out_flat.reshape(T, Bp, O)[:, :B, :]
    h_final = h_final[:B, :]
    return out_seq, h_final


def init_params(key, input_size, hidden_size, output_size):
    """Mimic nn.GRUCell / nn.Linear init: uniform +/- 1/sqrt(hidden_size)."""
    k = 1.0 / (hidden_size ** 0.5)
    keys = jax.random.split(key, 6)
    w_ih = jax.random.uniform(keys[0], (3 * hidden_size, input_size), jnp.float32, -k, k)
    w_hh = jax.random.uniform(keys[1], (3 * hidden_size, hidden_size), jnp.float32, -k, k)
    b_ih = jax.random.uniform(keys[2], (3 * hidden_size,), jnp.float32, -k, k)
    b_hh = jax.random.uniform(keys[3], (3 * hidden_size,), jnp.float32, -k, k)
    w_out = jax.random.uniform(keys[4], (output_size, hidden_size), jnp.float32, -k, k)
    b_out = jax.random.uniform(keys[5], (output_size,), jnp.float32, -k, k)
    return w_ih, w_hh, b_ih, b_hh, w_out, b_out


def _ref_forward_seq(x_seq, h0, w_ih, w_hh, b_ih, b_hh, w_out, b_out):
    """Pure-JAX step-by-step reference (PyTorch GRUCell semantics)."""
    h = h0
    outs = []
    for t in range(x_seq.shape[0]):
        x = x_seq[t]
        gi = x @ w_ih.T + b_ih
        gh = h @ w_hh.T + b_hh
        i_r, i_z, i_n = jnp.split(gi, 3, axis=1)
        h_r, h_z, h_n = jnp.split(gh, 3, axis=1)
        r = jax.nn.sigmoid(i_r + h_r)
        z = jax.nn.sigmoid(i_z + h_z)
        n = jnp.tanh(i_n + r * h_n)
        h = (1.0 - z) * n + z * h
        logits = h @ w_out.T + b_out
        outs.append(jax.nn.log_softmax(logits, axis=1))
    return jnp.stack(outs, axis=0), h


if __name__ == "__main__":
    input_size, hidden_size, output_size = 16, 32, 8
    batch, seq_len = 2, 8

    key = jax.random.PRNGKey(0)
    kx, kp = jax.random.split(key, 2)

    x_seq = jax.random.normal(kx, (seq_len, batch, input_size), jnp.float32)
    h0 = jnp.zeros((batch, hidden_size), jnp.float32)        # initHidden() per batch row
    params = init_params(kp, input_size, hidden_size, output_size)

    out_seq, h_final = gru_forward_seq(x_seq, h0, *params)
    jax.block_until_ready((out_seq, h_final))

    ref_out, ref_h = _ref_forward_seq(x_seq, h0, *params)
    assert jnp.allclose(out_seq, ref_out, atol=1e-4), "log-softmax output mismatch"
    assert jnp.allclose(h_final, ref_h, atol=1e-4), "final hidden mismatch"

    print("KERNEL_OK")
</pallas_src>

<mosaic_0001>
module attributes {stable_mosaic.version = 11 : i64} {
  func.func @_gru_seq_kernel(%arg0: memref<64x16xf32, #tpu.memory_space<vmem>>, %arg1: memref<8x32xf32, #tpu.memory_space<vmem>>, %arg2: memref<16x96xf32, #tpu.memory_space<vmem>>, %arg3: memref<32x96xf32, #tpu.memory_space<vmem>>, %arg4: memref<1x96xf32, #tpu.memory_space<vmem>>, %arg5: memref<1x32xf32, #tpu.memory_space<vmem>>, %arg6: memref<32x8xf32, #tpu.memory_space<vmem>>, %arg7: memref<1x8xf32, #tpu.memory_space<vmem>>, %arg8: memref<64x8xf32, #tpu.memory_space<vmem>>, %arg9: memref<8x32xf32, #tpu.memory_space<vmem>>, %arg10: memref<8x32xf32, #tpu.memory_space<vmem>>, %arg11: memref<64x96xf32, #tpu.memory_space<vmem>>, %arg12: memref<64x32xf32, #tpu.memory_space<vmem>>) attributes {dimension_semantics = [], scalar_prefetch = 0 : i64, scratch_operands = 3 : i64, tpu.core_type = #tpu.core_type<tc>} {
    %c0 = arith.constant 0 : index
    %c0_0 = arith.constant 0 : index
    %0 = vector.load %arg0[%c0, %c0_0] : memref<64x16xf32, #tpu.memory_space<vmem>>, vector<64x16xf32>
    %c0_1 = arith.constant 0 : index
    %c0_2 = arith.constant 0 : index
    %1 = vector.load %arg2[%c0_1, %c0_2] : memref<16x96xf32, #tpu.memory_space<vmem>>, vector<16x96xf32>
    %cst = arith.constant dense<0.000000e+00> : vector<64x96xf32>
    %2 = tpu.matmul %0, %1, %cst {dimension_numbers = #tpu.dot_dimension_numbers<[1], [0], [0], [1], [0, 0, 1, 1], [], []>} : vector<64x16xf32>, vector<16x96xf32>, vector<64x96xf32> -> vector<64x96xf32>
    %c0_3 = arith.constant 0 : index
    %c0_4 = arith.constant 0 : index
    %3 = vector.load %arg4[%c0_3, %c0_4] : memref<1x96xf32, #tpu.memory_space<vmem>>, vector<1x96xf32>
    %4 = vector.broadcast %3 : vector<1x96xf32> to vector<64x96xf32>
    %5 = arith.addf %2, %4 : vector<64x96xf32>
    %c0_5 = arith.constant 0 : index
    %c0_6 = arith.constant 0 : index
    %6 = vector.load %arg11[%c0_5, %c0_6] : memref<64x96xf32, #tpu.memory_space<vmem>>, vector<64x96xf32>
    tpu.vector_store %arg11[%c0_5, %c0_6], %5 {strides = array<i32>} : memref<64x96xf32, #tpu.memory_space<vmem>>, vector<64x96xf32>,
    %c0_7 = arith.constant 0 : index
    %c0_8 = arith.constant 0 : index
    %7 = vector.load %arg1[%c0_7, %c0_8] : memref<8x32xf32, #tpu.memory_space<vmem>>, vector<8x32xf32>
    %c0_9 = arith.constant 0 : index
    %c0_10 = arith.constant 0 : index
    %8 = vector.load %arg10[%c0_9, %c0_10] : memref<8x32xf32, #tpu.memory_space<vmem>>, vector<8x32xf32>
    tpu.vector_store %arg10[%c0_9, %c0_10], %7 {strides = array<i32>} : memref<8x32xf32, #tpu.memory_space<vmem>>, vector<8x32xf32>,
    %c0_11 = arith.constant 0 : index
    %c0_12 = arith.constant 0 : index
    %9 = vector.load %arg5[%c0_11, %c0_12] : memref<1x32xf32, #tpu.memory_space<vmem>>, vector<1x32xf32>
    %10 = vector.shape_cast %9 : vector<1x32xf32> to vector<1x32xf32>
    %11 = vector.broadcast %10 : vector<1x32xf32> to vector<8x32xf32>
    %c0_i32 = arith.constant 0 : i32
    %c8_i32 = arith.constant 8 : i32
    %12 = arith.muli %c0_i32, %c8_i32 : i32
    %13 = tpu.assume_multiple %12, 8 : i32
    %c0_13 = arith.constant 0 : index
    %c0_14 = arith.constant 0 : index
    %14 = vector.load %arg10[%c0_13, %c0_14] : memref<8x32xf32, #tpu.memory_space<vmem>>, vector<8x32xf32>
    %15 = arith.index_cast %13 : i32 to index
    %c0_15 = arith.constant 0 : index
    %16 = vector.load %arg11[%15, %c0_15] : memref<64x96xf32, #tpu.memory_space<vmem>>, vector<8x96xf32>
    %c0_16 = arith.constant 0 : index
    %c0_17 = arith.constant 0 : index
    %17 = vector.load %arg3[%c0_16, %c0_17] : memref<32x96xf32, #tpu.memory_space<vmem>>, vector<32x96xf32>
    %cst_18 = arith.constant dense<0.000000e+00> : vector<8x96xf32>
    %18 = tpu.matmul %14, %17, %cst_18 {dimension_numbers = #tpu.dot_dimension_numbers<[1], [0], [0], [1], [0, 0, 1, 1], [], []>} : vector<8x32xf32>, vector<32x96xf32>, vector<8x96xf32> -> vector<8x96xf32>
    %19 = vector.extract_strided_slice %16 {offsets = [0, 0], sizes = [8, 64], strides = [1, 1]} : vector<8x96xf32> to vector<8x64xf32>
    %20 = vector.extract_strided_slice %18 {offsets = [0, 0], sizes = [8, 64], strides = [1, 1]} : vector<8x96xf32> to vector<8x64xf32>
    %21 = arith.addf %19, %20 : vector<8x64xf32>
    %cst_19 = arith.constant 0.000000e+00 : f32
    %22 = vector.broadcast %cst_19 : f32 to vector<8x64xf32>
    %23 = arith.subf %22, %21 : vector<8x64xf32>
    %24 = math.exp %23 : vector<8x64xf32>
    %cst_20 = arith.constant 1.000000e+00 : f32
    %25 = vector.broadcast %cst_20 : f32 to vector<8x64xf32>
    %26 = arith.addf %25, %24 : vector<8x64xf32>
    %cst_21 = arith.constant 1.000000e+00 : f32
    %27 = vector.broadcast %cst_21 : f32 to vector<8x64xf32>
    %28 = arith.divf %27, %26 : vector<8x64xf32>
    %29 = vector.extract_strided_slice %28 {offsets = [0, 0], sizes = [8, 32], strides = [1, 1]} : vector<8x64xf32> to vector<8x32xf32>
    %30 = vector.extract_strided_slice %28 {offsets = [0, 32], sizes = [8, 32], strides = [1, 1]} : vector<8x64xf32> to vector<8x32xf32>
    %31 = vector.extract_strided_slice %16 {offsets = [0, 64], sizes = [8, 32], strides = [1, 1]} : vector<8x96xf32> to vector<8x32xf32>
    %32 = vector.extract_strided_slice %18 {offsets = [0, 64], sizes = [8, 32], strides = [1, 1]} : vector<8x96xf32> to vector<8x32xf32>
    %33 = arith.addf %32, %11 : vector<8x32xf32>
    %34 = arith.mulf %29, %33 : vector<8x32xf32>
    %35 = arith.addf %31, %34 : vector<8x32xf32>
    %36 = math.tanh %35 : vector<8x32xf32>
    %cst_22 = arith.constant 1.000000e+00 : f32
    %37 = vector.broadcast %cst_22 : f32 to vector<8x32xf32>
    %38 = arith.subf %37, %30 : vector<8x32xf32>
    %39 = arith.mulf %38, %36 : vector<8x32xf32>
    %40 = arith.mulf %30, %14 : vector<8x32xf32>
    %41 = arith.addf %39, %40 : vector<8x32xf32>
    %c0_23 = arith.constant 0 : index
    %c0_24 = arith.constant 0 : index
    %42 = vector.load %arg10[%c0_23, %c0_24] : memref<8x32xf32, #tpu.memory_space<vmem>>, vector<8x32xf32>
    tpu.vector_store %arg10[%c0_23, %c0_24], %41 {strides = array<i32>} : memref<8x32xf32, #tpu.memory_space<vmem>>, vector<8x32xf32>,
    %43 = arith.index_cast %13 : i32 to index
    %c0_25 = arith.constant 0 : index
    %44 = vector.load %arg12[%43, %c0_25] : memref<64x32xf32, #tpu.memory_space<vmem>>, vector<8x32xf32>
    tpu.vector_store %arg12[%43, %c0_25], %41 {strides = array<i32>} : memref<64x32xf32, #tpu.memory_space<vmem>>, vector<8x32xf32>,
    %c1_i32 = arith.constant 1 : i32
    %c8_i32_26 = arith.constant 8 : i32
    %45 = arith.muli %c1_i32, %c8_i32_26 : i32
    %46 = tpu.assume_multiple %45, 8 : i32
    %c0_27 = arith.constant 0 : index
    %c0_28 = arith.constant 0 : index
    %47 = vector.load %arg10[%c0_27, %c0_28] : memref<8x32xf32, #tpu.memory_space<vmem>>, vector<8x32xf32>
    %48 = arith.index_cast %46 : i32 to index
    %c0_29 = arith.constant 0 : index
    %49 = vector.load %arg11[%48, %c0_29] : memref<64x96xf32, #tpu.memory_space<vmem>>, vector<8x96xf32>
    %c0_30 = arith.constant 0 : index
    %c0_31 = arith.constant 0 : index
    %50 = vector.load %arg3[%c0_30, %c0_31] : memref<32x96xf32, #tpu.memory_space<vmem>>, vector<32x96xf32>
    %cst_32 = arith.constant dense<0.000000e+00> : vector<8x96xf32>
    %51 = tpu.matmul %47, %50, %cst_32 {dimension_numbers = #tpu.dot_dimension_numbers<[1], [0], [0], [1], [0, 0, 1, 1], [], []>} : vector<8x32xf32>, vector<32x96xf32>, vector<8x96xf32> -> vector<8x96xf32>
    %52 = vector.extract_strided_slice %49 {offsets = [0, 0], sizes = [8, 64], strides = [1, 1]} : vector<8x96xf32> to vector<8x64xf32>
    %53 = vector.extract_strided_slice %51 {offsets = [0, 0], sizes = [8, 64], strides = [1, 1]} : vector<8x96xf32> to vector<8x64xf32>
    %54 = arith.addf %52, %53 : vector<8x64xf32>
    %cst_33 = arith.constant 0.000000e+00 : f32
    %55 = vector.broadcast %cst_33 : f32 to vector<8x64xf32>
    %56 = arith.subf %55, %54 : vector<8x64xf32>
    %57 = math.exp %56 : vector<8x64xf32>
    %cst_34 = arith.constant 1.000000e+00 : f32
    %58 = vector.broadcast %cst_34 : f32 to vector<8x64xf32>
    %59 = arith.addf %58, %57 : vector<8x64xf32>
    %cst_35 = arith.constant 1.000000e+00 : f32
    %60 = vector.broadcast %cst_35 : f32 to vector<8x64xf32>
    %61 = arith.divf %60, %59 : vector<8x64xf32>
    %62 = vector.extract_strided_slice %61 {offsets = [0, 0], sizes = [8, 32], strides = [1, 1]} : vector<8x64xf32> to vector<8x32xf32>
    %63 = vector.extract_strided_slice %61 {offsets = [0, 32], sizes = [8, 32], strides = [1, 1]} : vector<8x64xf32> to vector<8x32xf32>
    %64 = vector.extract_strided_slice %49 {offsets = [0, 64], sizes = [8, 32], strides = [1, 1]} : vector<8x96xf32> to vector<8x32xf32>
    %65 = vector.extract_strided_slice %51 {offsets = [0, 64], sizes = [8, 32], strides = [1, 1]} : vector<8x96xf32> to vector<8x32xf32>
    %66 = arith.addf %65, %11 : vector<8x32xf32>
    %67 = arith.mulf %62, %66 : vector<8x32xf32>
    %68 = arith.addf %64, %67 : vector<8x32xf32>
    %69 = math.tanh %68 : vector<8x32xf32>
    %cst_36 = arith.constant 1.000000e+00 : f32
    %70 = vector.broadcast %cst_36 : f32 to vector<8x32xf32>
    %71 = arith.subf %70, %63 : vector<8x32xf32>
    %72 = arith.mulf %71, %69 : vector<8x32xf32>
    %73 = arith.mulf %63, %47 : vector<8x32xf32>
    %74 = arith.addf %72, %73 : vector<8x32xf32>
    %c0_37 = arith.constant 0 : index
    %c0_38 = arith.constant 0 : index
    %75 = vector.load %arg10[%c0_37, %c0_38] : memref<8x32xf32, #tpu.memory_space<vmem>>, vector<8x32xf32>
    tpu.vector_store %arg10[%c0_37, %c0_38], %74 {strides = array<i32>} : memref<8x32xf32, #tpu.memory_space<vmem>>, vector<8x32xf32>,
    %76 = arith.index_cast %46 : i32 to index
    %c0_39 = arith.constant 0 : index
    %77 = vector.load %arg12[%76, %c0_39] : memref<64x32xf32, #tpu.memory_space<vmem>>, vector<8x32xf32>
    tpu.vector_store %arg12[%76, %c0_39], %74 {strides = array<i32>} : memref<64x32xf32, #tpu.memory_space<vmem>>, vector<8x32xf32>,
    %c2_i32 = arith.constant 2 : i32
    %c8_i32_40 = arith.constant 8 : i32
    %78 = arith.muli %c2_i32, %c8_i32_40 : i32
    %79 = tpu.assume_multiple %78, 8 : i32
    %c0_41 = arith.constant 0 : index
    %c0_42 = arith.constant 0 : index
    %80 = vector.load %arg10[%c0_41, %c0_42] : memref<8x32xf32, #tpu.memory_space<vmem>>, vector<8x32xf32>
    %81 = arith.index_cast %79 : i32 to index
    %c0_43 = arith.constant 0 : index
    %82 = vector.load %arg11[%81, %c0_43] : memref<64x96xf32, #tpu.memory_space<vmem>>, vector<8x96xf32>
    %c0_44 = arith.constant 0 : index
    %c0_45 = arith.constant 0 : index
    %83 = vector.load %arg3[%c0_44, %c0_45] : memref<32x96xf32, #tpu.memory_space<vmem>>, vector<32x96xf32>
    %cst_46 = arith.constant dense<0.000000e+00> : vector<8x96xf32>
    %84 = tpu.matmul %80, %83, %cst_46 {dimension_numbers = #tpu.dot_dimension_numbers<[1], [0], [0], [1], [0, 0, 1, 1], [], []>} : vector<8x32xf32>, vector<32x96xf32>, vector<8x96xf32> -> vector<8x96xf32>
    %85 = vector.extract_strided_slice %82 {offsets = [0, 0], sizes = [8, 64], strides = [1, 1]} : vector<8x96xf32> to vector<8x64xf32>
    %86 = vector.extract_strided_slice %84 {offsets = [0, 0], sizes = [8, 64], strides = [1, 1]} : vector<8x96xf32> to vector<8x64xf32>
    %87 = arith.addf %85, %86 : vector<8x64xf32>
    %cst_47 = arith.constant 0.000000e+00 : f32
    %88 = vector.broadcast %cst_47 : f32 to vector<8x64xf32>
    %89 = arith.subf %88, %87 : vector<8x64xf32>
    %90 = math.exp %89 : vector<8x64xf32>
    %cst_48 = arith.constant 1.000000e+00 : f32
    %91 = vector.broadcast %cst_48 : f32 to vector<8x64xf32>
    %92 = arith.addf %91, %90 : vector<8x64xf32>
    %cst_49 = arith.constant 1.000000e+00 : f32
    %93 = vector.broadcast %cst_49 : f32 to vector<8x64xf32>
    %94 = arith.divf %93, %92 : vector<8x64xf32>
    %95 = vector.extract_strided_slice %94 {offsets = [0, 0], sizes = [8, 32], strides = [1, 1]} : vector<8x64xf32> to vector<8x32xf32>
    %96 = vector.extract_strided_slice %94 {offsets = [0, 32], sizes = [8, 32], strides = [1, 1]} : vector<8x64xf32> to vector<8x32xf32>
    %97 = vector.extract_strided_slice %82 {offsets = [0, 64], sizes = [8, 32], strides = [1, 1]} : vector<8x96xf32> to vector<8x32xf32>
    %98 = vector.extract_strided_slice %84 {offsets = [0, 64], sizes = [8, 32], strides = [1, 1]} : vector<8x96xf32> to vector<8x32xf32>
    %99 = arith.addf %98, %11 : vector<8x32xf32>
    %100 = arith.mulf %95, %99 : vector<8x32xf32>
    %101 = arith.addf %97, %100 : vector<8x32xf32>
    %102 = math.tanh %101 : vector<8x32xf32>
    %cst_50 = arith.constant 1.000000e+00 : f32
    %103 = vector.broadcast %cst_50 : f32 to vector<8x32xf32>
    %104 = arith.subf %103, %96 : vector<8x32xf32>
    %105 = arith.mulf %104, %102 : vector<8x32xf32>
    %106 = arith.mulf %96, %80 : vector<8x32xf32>
    %107 = arith.addf %105, %106 : vector<8x32xf32>
    %c0_51 = arith.constant 0 : index
    %c0_52 = arith.constant 0 : index
    %108 = vector.load %arg10[%c0_51, %c0_52] : memref<8x32xf32, #tpu.memory_space<vmem>>, vector<8x32xf32>
    tpu.vector_store %arg10[%c0_51, %c0_52], %107 {strides = array<i32>} : memref<8x32xf32, #tpu.memory_space<vmem>>, vector<8x32xf32>,
    %109 = arith.index_cast %79 : i32 to index
    %c0_53 = arith.constant 0 : index
    %110 = vector.load %arg12[%109, %c0_53] : memref<64x32xf32, #tpu.memory_space<vmem>>, vector<8x32xf32>
    tpu.vector_store %arg12[%109, %c0_53], %107 {strides = array<i32>} : memref<64x32xf32, #tpu.memory_space<vmem>>, vector<8x32xf32>,
    %c3_i32 = arith.constant 3 : i32
    %c8_i32_54 = arith.constant 8 : i32
    %111 = arith.muli %c3_i32, %c8_i32_54 : i32
    %112 = tpu.assume_multiple %111, 8 : i32
    %c0_55 = arith.constant 0 : index
    %c0_56 = arith.constant 0 : index
    %113 = vector.load %arg10[%c0_55, %c0_56] : memref<8x32xf32, #tpu.memory_space<vmem>>, vector<8x32xf32>
    %114 = arith.index_cast %112 : i32 to index
    %c0_57 = arith.constant 0 : index
    %115 = vector.load %arg11[%114, %c0_57] : memref<64x96xf32, #tpu.memory_space<vmem>>, vector<8x96xf32>
    %c0_58 = arith.constant 0 : index
    %c0_59 = arith.constant 0 : index
    %116 = vector.load %arg3[%c0_58, %c0_59] : memref<32x96xf32, #tpu.memory_space<vmem>>, vector<32x96xf32>
    %cst_60 = arith.constant dense<0.000000e+00> : vector<8x96xf32>
    %117 = tpu.matmul %113, %116, %cst_60 {dimension_numbers = #tpu.dot_dimension_numbers<[1], [0], [0], [1], [0, 0, 1, 1], [], []>} : vector<8x32xf32>, vector<32x96xf32>, vector<8x96xf32> -> vector<8x96xf32>
    %118 = vector.extract_strided_slice %115 {offsets = [0, 0], sizes = [8, 64], strides = [1, 1]} : vector<8x96xf32> to vector<8x64xf32>
    %119 = vector.extract_strided_slice %117 {offsets = [0, 0], sizes = [8, 64], strides = [1, 1]} : vector<8x96xf32> to vector<8x64xf32>
    %120 = arith.addf %118, %119 : vector<8x64xf32>
    %cst_61 = arith.constant 0.000000e+00 : f32
    %121 = vector.broadcast %cst_61 : f32 to vector<8x64xf32>
    %122 = arith.subf %121, %120 : vector<8x64xf32>
    %123 = math.exp %122 : vector<8x64xf32>
    %cst_62 = arith.constant 1.000000e+00 : f32
    %124 = vector.broadcast %cst_62 : f32 to vector<8x64xf32>
    %125 = arith.addf %124, %123 : vector<8x64xf32>
    %cst_63 = arith.constant 1.000000e+00 : f32
    %126 = vector.broadcast %cst_63 : f32 to vector<8x64xf32>
    %127 = arith.divf %126, %125 : vector<8x64xf32>
    %128 = vector.extract_strided_slice %127 {offsets = [0, 0], sizes = [8, 32], strides = [1, 1]} : vector<8x64xf32> to vector<8x32xf32>
    %129 = vector.extract_strided_slice %127 {offsets = [0, 32], sizes = [8, 32], strides = [1, 1]} : vector<8x64xf32> to vector<8x32xf32>
    %130 = vector.extract_strided_slice %115 {offsets = [0, 64], sizes = [8, 32], strides = [1, 1]} : vector<8x96xf32> to vector<8x32xf32>
    %131 = vector.extract_strided_slice %117 {offsets = [0, 64], sizes = [8, 32], strides = [1, 1]} : vector<8x96xf32> to vector<8x32xf32>
    %132 = arith.addf %131, %11 : vector<8x32xf32>
    %133 = arith.mulf %128, %132 : vector<8x32xf32>
    %134 = arith.addf %130, %133 : vector<8x32xf32>
    %135 = math.tanh %134 : vector<8x32xf32>
    %cst_64 = arith.constant 1.000000e+00 : f32
    %136 = vector.broadcast %cst_64 : f32 to vector<8x32xf32>
    %137 = arith.subf %136, %129 : vector<8x32xf32>
    %138 = arith.mulf %137, %135 : vector<8x32xf32>
    %139 = arith.mulf %129, %113 : vector<8x32xf32>
    %140 = arith.addf %138, %139 : vector<8x32xf32>
    %c0_65 = arith.constant 0 : index
    %c0_66 = arith.constant 0 : index
    %141 = vector.load %arg10[%c0_65, %c0_66] : memref<8x32xf32, #tpu.memory_space<vmem>>, vector<8x32xf32>
    tpu.vector_store %arg10[%c0_65, %c0_66], %140 {strides = array<i32>} : memref<8x32xf32, #tpu.memory_space<vmem>>, vector<8x32xf32>,
    %142 = arith.index_cast %112 : i32 to index
    %c0_67 = arith.constant 0 : index
    %143 = vector.load %arg12[%142, %c0_67] : memref<64x32xf32, #tpu.memory_space<vmem>>, vector<8x32xf32>
    tpu.vector_store %arg12[%142, %c0_67], %140 {strides = array<i32>} : memref<64x32xf32, #tpu.memory_space<vmem>>, vector<8x32xf32>,
    %c4_i32 = arith.constant 4 : i32
    %c8_i32_68 = arith.constant 8 : i32
    %144 = arith.muli %c4_i32, %c8_i32_68 : i32
    %145 = tpu.assume_multiple %144, 8 : i32
    %c0_69 = arith.constant 0 : index
    %c0_70 = arith.constant 0 : index
    %146 = vector.load %arg10[%c0_69, %c0_70] : memref<8x32xf32, #tpu.memory_space<vmem>>, vector<8x32xf32>
    %147 = arith.index_cast %145 : i32 to index
    %c0_71 = arith.constant 0 : index
    %148 = vector.load %arg11[%147, %c0_71] : memref<64x96xf32, #tpu.memory_space<vmem>>, vector<8x96xf32>
    %c0_72 = arith.constant 0 : index
    %c0_73 = arith.constant 0 : index
    %149 = vector.load %arg3[%c0_72, %c0_73] : memref<32x96xf32, #tpu.memory_space<vmem>>, vector<32x96xf32>
    %cst_74 = arith.constant dense<0.000000e+00> : vector<8x96xf32>
    %150 = tpu.matmul %146, %149, %cst_74 {dimension_numbers = #tpu.dot_dimension_numbers<[1], [0], [0], [1], [0, 0, 1, 1], [], []>} : vector<8x32xf32>, vector<32x96xf32>, vector<8x96xf32> -> vector<8x96xf32>
    %151 = vector.extract_strided_slice %148 {offsets = [0, 0], sizes = [8, 64], strides = [1, 1]} : vector<8x96xf32> to vector<8x64xf32>
    %152 = vector.extract_strided_slice %150 {offsets = [0, 0], sizes = [8, 64], strides = [1, 1]} : vector<8x96xf32> to vector<8x64xf32>
    %153 = arith.addf %151, %152 : vector<8x64xf32>
    %cst_75 = arith.constant 0.000000e+00 : f32
    %154 = vector.broadcast %cst_75 : f32 to vector<8x64xf32>
    %155 = arith.subf %154, %153 : vector<8x64xf32>
    %156 = math.exp %155 : vector<8x64xf32>
    %cst_76 = arith.constant 1.000000e+00 : f32
    %157 = vector.broadcast %cst_76 : f32 to vector<8x64xf32>
    %158 = arith.addf %157, %156 : vector<8x64xf32>
    %cst_77 = arith.constant 1.000000e+00 : f32
    %159 = vector.broadcast %cst_77 : f32 to vector<8x64xf32>
    %160 = arith.divf %159, %158 : vector<8x64xf32>
    %161 = vector.extract_strided_slice %160 {offsets = [0, 0], sizes = [8, 32], strides = [1, 1]} : vector<8x64xf32> to vector<8x32xf32>
    %162 = vector.extract_strided_slice %160 {offsets = [0, 32], sizes = [8, 32], strides = [1, 1]} : vector<8x64xf32> to vector<8x32xf32>
    %163 = vector.extract_strided_slice %148 {offsets = [0, 64], sizes = [8, 32], strides = [1, 1]} : vector<8x96xf32> to vector<8x32xf32>
    %164 = vector.extract_strided_slice %150 {offsets = [0, 64], sizes = [8, 32], strides = [1, 1]} : vector<8x96xf32> to vector<8x32xf32>
    %165 = arith.addf %164, %11 : vector<8x32xf32>
    %166 = arith.mulf %161, %165 : vector<8x32xf32>
    %167 = arith.addf %163, %166 : vector<8x32xf32>
    %168 = math.tanh %167 : vector<8x32xf32>
    %cst_78 = arith.constant 1.000000e+00 : f32
    %169 = vector.broadcast %cst_78 : f32 to vector<8x32xf32>
    %170 = arith.subf %169, %162 : vector<8x32xf32>
    %171 = arith.mulf %170, %168 : vector<8x32xf32>
    %172 = arith.mulf %162, %146 : vector<8x32xf32>
    %173 = arith.addf %171, %172 : vector<8x32xf32>
    %c0_79 = arith.constant 0 : index
    %c0_80 = arith.constant 0 : index
    %174 = vector.load %arg10[%c0_79, %c0_80] : memref<8x32xf32, #tpu.memory_space<vmem>>, vector<8x32xf32>
    tpu.vector_store %arg10[%c0_79, %c0_80], %173 {strides = array<i32>} : memref<8x32xf32, #tpu.memory_space<vmem>>, vector<8x32xf32>,
    %175 = arith.index_cast %145 : i32 to index
    %c0_81 = arith.constant 0 : index
    %176 = vector.load %arg12[%175, %c0_81] : memref<64x32xf32, #tpu.memory_space<vmem>>, vector<8x32xf32>
    tpu.vector_store %arg12[%175, %c0_81], %173 {strides = array<i32>} : memref<64x32xf32, #tpu.memory_space<vmem>>, vector<8x32xf32>,
    %c5_i32 = arith.constant 5 : i32
    %c8_i32_82 = arith.constant 8 : i32
    %177 = arith.muli %c5_i32, %c8_i32_82 : i32
    %178 = tpu.assume_multiple %177, 8 : i32
    %c0_83 = arith.constant 0 : index
    %c0_84 = arith.constant 0 : index
    %179 = vector.load %arg10[%c0_83, %c0_84] : memref<8x32xf32, #tpu.memory_space<vmem>>, vector<8x32xf32>
    %180 = arith.index_cast %178 : i32 to index
    %c0_85 = arith.constant 0 : index
    %181 = vector.load %arg11[%180, %c0_85] : memref<64x96xf32, #tpu.memory_space<vmem>>, vector<8x96xf32>
    %c0_86 = arith.constant 0 : index
    %c0_87 = arith.constant 0 : index
    %182 = vector.load %arg3[%c0_86, %c0_87] : memref<32x96xf32, #tpu.memory_space<vmem>>, vector<32x96xf32>
    %cst_88 = arith.constant dense<0.000000e+00> : vector<8x96xf32>
    %183 = tpu.matmul %179, %182, %cst_88 {dimension_numbers = #tpu.dot_dimension_numbers<[1], [0], [0], [1], [0, 0, 1, 1], [], []>} : vector<8x32xf32>, vector<32x96xf32>, vector<8x96xf32> -> vector<8x96xf32>
    %184 = vector.extract_strided_slice %181 {offsets = [0, 0], sizes = [8, 64], strides = [1, 1]} : vector<8x96xf32> to vector<8x64xf32>
    %185 = vector.extract_strided_slice %183 {offsets = [0, 0], sizes = [8, 64], strides = [1, 1]} : vector<8x96xf32> to vector<8x64xf32>
    %186 = arith.addf %184, %185 : vector<8x64xf32>
    %cst_89 = arith.constant 0.000000e+00 : f32
    %187 = vector.broadcast %cst_89 : f32 to vector<8x64xf32>
    %188 = arith.subf %187, %186 : vector<8x64xf32>
    %189 = math.exp %188 : vector<8x64xf32>
    %cst_90 = arith.constant 1.000000e+00 : f32
    %190 = vector.broadcast %cst_90 : f32 to vector<8x64xf32>
    %191 = arith.addf %190, %189 : vector<8x64xf32>
    %cst_91 = arith.constant 1.000000e+00 : f32
    %192 = vector.broadcast %cst_91 : f32 to vector<8x64xf32>
    %193 = arith.divf %192, %191 : vector<8x64xf32>
    %194 = vector.extract_strided_slice %193 {offsets = [0, 0], sizes = [8, 32], strides = [1, 1]} : vector<8x64xf32> to vector<8x32xf32>
    %195 = vector.extract_strided_slice %193 {offsets = [0, 32], sizes = [8, 32], strides = [1, 1]} : vector<8x64xf32> to vector<8x32xf32>
    %196 = vector.extract_strided_slice %181 {offsets = [0, 64], sizes = [8, 32], strides = [1, 1]} : vector<8x96xf32> to vector<8x32xf32>
    %197 = vector.extract_strided_slice %183 {offsets = [0, 64], sizes = [8, 32], strides = [1, 1]} : vector<8x96xf32> to vector<8x32xf32>
    %198 = arith.addf %197, %11 : vector<8x32xf32>
    %199 = arith.mulf %194, %198 : vector<8x32xf32>
    %200 = arith.addf %196, %199 : vector<8x32xf32>
    %201 = math.tanh %200 : vector<8x32xf32>
    %cst_92 = arith.constant 1.000000e+00 : f32
    %202 = vector.broadcast %cst_92 : f32 to vector<8x32xf32>
    %203 = arith.subf %202, %195 : vector<8x32xf32>
    %204 = arith.mulf %203, %201 : vector<8x32xf32>
    %205 = arith.mulf %195, %179 : vector<8x32xf32>
    %206 = arith.addf %204, %205 : vector<8x32xf32>
    %c0_93 = arith.constant 0 : index
    %c0_94 = arith.constant 0 : index
    %207 = vector.load %arg10[%c0_93, %c0_94] : memref<8x32xf32, #tpu.memory_space<vmem>>, vector<8x32xf32>
    tpu.vector_store %arg10[%c0_93, %c0_94], %206 {strides = array<i32>} : memref<8x32xf32, #tpu.memory_space<vmem>>, vector<8x32xf32>,
    %208 = arith.index_cast %178 : i32 to index
    %c0_95 = arith.constant 0 : index
    %209 = vector.load %arg12[%208, %c0_95] : memref<64x32xf32, #tpu.memory_space<vmem>>, vector<8x32xf32>
    tpu.vector_store %arg12[%208, %c0_95], %206 {strides = array<i32>} : memref<64x32xf32, #tpu.memory_space<vmem>>, vector<8x32xf32>,
    %c6_i32 = arith.constant 6 : i32
    %c8_i32_96 = arith.constant 8 : i32
    %210 = arith.muli %c6_i32, %c8_i32_96 : i32
    %211 = tpu.assume_multiple %210, 8 : i32
    %c0_97 = arith.constant 0 : index
    %c0_98 = arith.constant 0 : index
    %212 = vector.load %arg10[%c0_97, %c0_98] : memref<8x32xf32, #tpu.memory_space<vmem>>, vector<8x32xf32>
    %213 = arith.index_cast %211 : i32 to index
    %c0_99 = arith.constant 0 : index
    %214 = vector.load %arg11[%213, %c0_99] : memref<64x96xf32, #tpu.memory_space<vmem>>, vector<8x96xf32>
    %c0_100 = arith.constant 0 : index
    %c0_101 = arith.constant 0 : index
    %215 = vector.load %arg3[%c0_100, %c0_101] : memref<32x96xf32, #tpu.memory_space<vmem>>, vector<32x96xf32>
    %cst_102 = arith.constant dense<0.000000e+00> : vector<8x96xf32>
    %216 = tpu.matmul %212, %215, %cst_102 {dimension_numbers = #tpu.dot_dimension_numbers<[1], [0], [0], [1], [0, 0, 1, 1], [], []>} : vector<8x32xf32>, vector<32x96xf32>, vector<8x96xf32> -> vector<8x96xf32>
    %217 = vector.extract_strided_slice %214 {offsets = [0, 0], sizes = [8, 64], strides = [1, 1]} : vector<8x96xf32> to vector<8x64xf32>
    %218 = vector.extract_strided_slice %216 {offsets = [0, 0], sizes = [8, 64], strides = [1, 1]} : vector<8x96xf32> to vector<8x64xf32>
    %219 = arith.addf %217, %218 : vector<8x64xf32>
    %cst_103 = arith.constant 0.000000e+00 : f32
    %220 = vector.broadcast %cst_103 : f32 to vector<8x64xf32>
    %221 = arith.subf %220, %219 : vector<8x64xf32>
    %222 = math.exp %221 : vector<8x64xf32>
    %cst_104 = arith.constant 1.000000e+00 : f32
    %223 = vector.broadcast %cst_104 : f32 to vector<8x64xf32>
    %224 = arith.addf %223, %222 : vector<8x64xf32>
    %cst_105 = arith.constant 1.000000e+00 : f32
    %225 = vector.broadcast %cst_105 : f32 to vector<8x64xf32>
    %226 = arith.divf %225, %224 : vector<8x64xf32>
    %227 = vector.extract_strided_slice %226 {offsets = [0, 0], sizes = [8, 32], strides = [1, 1]} : vector<8x64xf32> to vector<8x32xf32>
    %228 = vector.extract_strided_slice %226 {offsets = [0, 32], sizes = [8, 32], strides = [1, 1]} : vector<8x64xf32> to vector<8x32xf32>
    %229 = vector.extract_strided_slice %214 {offsets = [0, 64], sizes = [8, 32], strides = [1, 1]} : vector<8x96xf32> to vector<8x32xf32>
    %230 = vector.extract_strided_slice %216 {offsets = [0, 64], sizes = [8, 32], strides = [1, 1]} : vector<8x96xf32> to vector<8x32xf32>
    %231 = arith.addf %230, %11 : vector<8x32xf32>
    %232 = arith.mulf %227, %231 : vector<8x32xf32>
    %233 = arith.addf %229, %232 : vector<8x32xf32>
    %234 = math.tanh %233 : vector<8x32xf32>
    %cst_106 = arith.constant 1.000000e+00 : f32
    %235 = vector.broadcast %cst_106 : f32 to vector<8x32xf32>
    %236 = arith.subf %235, %228 : vector<8x32xf32>
    %237 = arith.mulf %236, %234 : vector<8x32xf32>
    %238 = arith.mulf %228, %212 : vector<8x32xf32>
    %239 = arith.addf %237, %238 : vector<8x32xf32>
    %c0_107 = arith.constant 0 : index
    %c0_108 = arith.constant 0 : index
    %240 = vector.load %arg10[%c0_107, %c0_108] : memref<8x32xf32, #tpu.memory_space<vmem>>, vector<8x32xf32>
    tpu.vector_store %arg10[%c0_107, %c0_108], %239 {strides = array<i32>} : memref<8x32xf32, #tpu.memory_space<vmem>>, vector<8x32xf32>,
    %241 = arith.index_cast %211 : i32 to index
    %c0_109 = arith.constant 0 : index
    %242 = vector.load %arg12[%241, %c0_109] : memref<64x32xf32, #tpu.memory_space<vmem>>, vector<8x32xf32>
    tpu.vector_store %arg12[%241, %c0_109], %239 {strides = array<i32>} : memref<64x32xf32, #tpu.memory_space<vmem>>, vector<8x32xf32>,
    %c7_i32 = arith.constant 7 : i32
    %c8_i32_110 = arith.constant 8 : i32
    %243 = arith.muli %c7_i32, %c8_i32_110 : i32
    %244 = tpu.assume_multiple %243, 8 : i32
    %c0_111 = arith.constant 0 : index
    %c0_112 = arith.constant 0 : index
    %245 = vector.load %arg10[%c0_111, %c0_112] : memref<8x32xf32, #tpu.memory_space<vmem>>, vector<8x32xf32>
    %246 = arith.index_cast %244 : i32 to index
    %c0_113 = arith.constant 0 : index
    %247 = vector.load %arg11[%246, %c0_113] : memref<64x96xf32, #tpu.memory_space<vmem>>, vector<8x96xf32>
    %c0_114 = arith.constant 0 : index
    %c0_115 = arith.constant 0 : index
    %248 = vector.load %arg3[%c0_114, %c0_115] : memref<32x96xf32, #tpu.memory_space<vmem>>, vector<32x96xf32>
    %cst_116 = arith.constant dense<0.000000e+00> : vector<8x96xf32>
    %249 = tpu.matmul %245, %248, %cst_116 {dimension_numbers = #tpu.dot_dimension_numbers<[1], [0], [0], [1], [0, 0, 1, 1], [], []>} : vector<8x32xf32>, vector<32x96xf32>, vector<8x96xf32> -> vector<8x96xf32>
    %250 = vector.extract_strided_slice %247 {offsets = [0, 0], sizes = [8, 64], strides = [1, 1]} : vector<8x96xf32> to vector<8x64xf32>
    %251 = vector.extract_strided_slice %249 {offsets = [0, 0], sizes = [8, 64], strides = [1, 1]} : vector<8x96xf32> to vector<8x64xf32>
    %252 = arith.addf %250, %251 : vector<8x64xf32>
    %cst_117 = arith.constant 0.000000e+00 : f32
    %253 = vector.broadcast %cst_117 : f32 to vector<8x64xf32>
    %254 = arith.subf %253, %252 : vector<8x64xf32>
    %255 = math.exp %254 : vector<8x64xf32>
    %cst_118 = arith.constant 1.000000e+00 : f32
    %256 = vector.broadcast %cst_118 : f32 to vector<8x64xf32>
    %257 = arith.addf %256, %255 : vector<8x64xf32>
    %cst_119 = arith.constant 1.000000e+00 : f32
    %258 = vector.broadcast %cst_119 : f32 to vector<8x64xf32>
    %259 = arith.divf %258, %257 : vector<8x64xf32>
    %260 = vector.extract_strided_slice %259 {offsets = [0, 0], sizes = [8, 32], strides = [1, 1]} : vector<8x64xf32> to vector<8x32xf32>
    %261 = vector.extract_strided_slice %259 {offsets = [0, 32], sizes = [8, 32], strides = [1, 1]} : vector<8x64xf32> to vector<8x32xf32>
    %262 = vector.extract_strided_slice %247 {offsets = [0, 64], sizes = [8, 32], strides = [1, 1]} : vector<8x96xf32> to vector<8x32xf32>
    %263 = vector.extract_strided_slice %249 {offsets = [0, 64], sizes = [8, 32], strides = [1, 1]} : vector<8x96xf32> to vector<8x32xf32>
    %264 = arith.addf %263, %11 : vector<8x32xf32>
    %265 = arith.mulf %260, %264 : vector<8x32xf32>
    %266 = arith.addf %262, %265 : vector<8x32xf32>
    %267 = math.tanh %266 : vector<8x32xf32>
    %cst_120 = arith.constant 1.000000e+00 : f32
    %268 = vector.broadcast %cst_120 : f32 to vector<8x32xf32>
    %269 = arith.subf %268, %261 : vector<8x32xf32>
    %270 = arith.mulf %269, %267 : vector<8x32xf32>
    %271 = arith.mulf %261, %245 : vector<8x32xf32>
    %272 = arith.addf %270, %271 : vector<8x32xf32>
    %c0_121 = arith.constant 0 : index
    %c0_122 = arith.constant 0 : index
    %273 = vector.load %arg10[%c0_121, %c0_122] : memref<8x32xf32, #tpu.memory_space<vmem>>, vector<8x32xf32>
    tpu.vector_store %arg10[%c0_121, %c0_122], %272 {strides = array<i32>} : memref<8x32xf32, #tpu.memory_space<vmem>>, vector<8x32xf32>,
    %274 = arith.index_cast %244 : i32 to index
    %c0_123 = arith.constant 0 : index
    %275 = vector.load %arg12[%274, %c0_123] : memref<64x32xf32, #tpu.memory_space<vmem>>, vector<8x32xf32>
    tpu.vector_store %arg12[%274, %c0_123], %272 {strides = array<i32>} : memref<64x32xf32, #tpu.memory_space<vmem>>, vector<8x32xf32>,
    %c8_i32_124 = arith.constant 8 : i32
    %c0_125 = arith.constant 0 : index
    %c0_126 = arith.constant 0 : index
    %276 = vector.load %arg10[%c0_125, %c0_126] : memref<8x32xf32, #tpu.memory_space<vmem>>, vector<8x32xf32>
    %c0_127 = arith.constant 0 : index
    %c0_128 = arith.constant 0 : index
    %277 = vector.load %arg9[%c0_127, %c0_128] : memref<8x32xf32, #tpu.memory_space<vmem>>, vector<8x32xf32>
    tpu.vector_store %arg9[%c0_127, %c0_128], %276 {strides = array<i32>} : memref<8x32xf32, #tpu.memory_space<vmem>>, vector<8x32xf32>,
    %c0_129 = arith.constant 0 : index
    %c0_130 = arith.constant 0 : index
    %278 = vector.load %arg12[%c0_129, %c0_130] : memref<64x32xf32, #tpu.memory_space<vmem>>, vector<64x32xf32>
    %c0_131 = arith.constant 0 : index
    %c0_132 = arith.constant 0 : index
    %279 = vector.load %arg6[%c0_131, %c0_132] : memref<32x8xf32, #tpu.memory_space<vmem>>, vector<32x8xf32>
    %cst_133 = arith.constant dense<0.000000e+00> : vector<64x8xf32>
    %280 = tpu.matmul %278, %279, %cst_133 {dimension_numbers = #tpu.dot_dimension_numbers<[1], [0], [0], [1], [0, 0, 1, 1], [], []>} : vector<64x32xf32>, vector<32x8xf32>, vector<64x8xf32> -> vector<64x8xf32>
    %c0_134 = arith.constant 0 : index
    %c0_135 = arith.constant 0 : index
    %281 = vector.load %arg7[%c0_134, %c0_135] : memref<1x8xf32, #tpu.memory_space<vmem>>, vector<1x8xf32>
    %282 = vector.broadcast %281 : vector<1x8xf32> to vector<64x8xf32>
    %283 = arith.addf %280, %282 : vector<64x8xf32>
    %cst_136 = arith.constant dense<0xFF800000> : vector<64xf32>
    %284 = vector.multi_reduction <maximumf>, %283, %cst_136 [1] : vector<64x8xf32> to vector<64xf32>
    %285 = vector.shape_cast %284 : vector<64xf32> to vector<64x1xf32>
    %286 = vector.broadcast %285 : vector<64x1xf32> to vector<64x8xf32>
    %287 = arith.subf %283, %286 : vector<64x8xf32>
    %288 = math.exp %287 : vector<64x8xf32>
    %cst_137 = arith.constant dense<0.000000e+00> : vector<64xf32>
    %289 = vector.multi_reduction <add>, %288, %cst_137 [1] : vector<64x8xf32> to vector<64xf32>
    %290 = vector.shape_cast %289 : vector<64xf32> to vector<64x1xf32>
    %291 = math.log %290 : vector<64x1xf32>
    %292 = vector.broadcast %291 : vector<64x1xf32> to vector<64x8xf32>
    %293 = arith.subf %287, %292 : vector<64x8xf32>
    %c0_138 = arith.constant 0 : index
    %c0_139 = arith.constant 0 : index
    %294 = vector.load %arg8[%c0_138, %c0_139] : memref<64x8xf32, #tpu.memory_space<vmem>>, vector<64x8xf32>
    tpu.vector_store %arg8[%c0_138, %c0_139], %293 {strides = array<i32>} : memref<64x8xf32, #tpu.memory_space<vmem>>, vector<64x8xf32>,
    return
  }
}

</mosaic_0001>

<llo_original>
// kernel: tpu_custom_call.1
$region0: #{tpu_custom_call.1}
  #allocation0 [shape = 'u32[]', space=smem, size = 0x4, offset = 0x4, fixed_abs, tag = 'smem constant byte address 0x4 - core index']
  #allocation1 [shape = 'u32[144,128]{1,0:T(1,128)}', space=vmem, size = 0x12000, scoped, tag = 'internal scratch']
  #allocation2 [shape = 'f32[8,32]{1,0:T(8,128)}', space=vmem, size = 0x1000, scoped, tag = 'scratch operand']
  #allocation3 [shape = 'f32[64,96]{1,0:T(8,128)}', space=vmem, size = 0x8000, scoped, tag = 'scratch operand']
  #allocation4 [shape = 'f32[64,32]{1,0:T(8,128)}', space=vmem, size = 0x8000, scoped, tag = 'scratch operand']
  %s0 = inlined_call_operand.vmem [shape: f32[64,16], index: 0, kind: input, shape index: {}]
  %s1 = inlined_call_operand.vmem [shape: f32[8,32], index: 1, kind: input, shape index: {}]
  %s2 = inlined_call_operand.vmem [shape: f32[16,96], index: 2, kind: input, shape index: {}]
  %s3 = inlined_call_operand.vmem [shape: f32[32,96], index: 3, kind: input, shape index: {}]
  %s4 = inlined_call_operand.vmem [shape: f32[1,96], index: 4, kind: input, shape index: {}]
  %s5 = inlined_call_operand.vmem [shape: f32[1,32], index: 5, kind: input, shape index: {}]
  %s6 = inlined_call_operand.vmem [shape: f32[32,8], index: 6, kind: input, shape index: {}]
  %s7 = inlined_call_operand.vmem [shape: f32[1,8], index: 7, kind: input, shape index: {}]
  %s8 = inlined_call_operand.vmem [shape: f32[64,8], index: 8, kind: output, shape index: {0}]
  %s9 = inlined_call_operand.hbm [shape: f32[8,32], index: 9, kind: output, shape index: {1}]
  %10 = xla_tuple %s8, %s9
  %s11 = sld [smem:[#allocation0]]
  $region50: #{tpu_custom_call.1} parent=0
    _
  %s13 = ssub.s32 1, %s11
  %s14 = scalar_select 0, %s13, %s11
  $region1: #{tpu_custom_call.1} parent=0
    #allocation5 [shape = 'u8[4096]{0}', space=vmem, size = 0x1000, scoped, tag = 'output window, operand 1, single buffered']
    #allocation6 [shape = 's32[1]{0}', space=sflag, size = 0x4, scoped, tag = 'scoped memory for tpu_custom_call.1']
    %15 = vsyncpa [#allocation6], 0
    // Predicated region
    $region2: #{tpu_custom_call.1} parent=1 // pred_check
      _
    $region3: #{tpu_custom_call.1} parent=1 // pred_check_branch
      %17 = sbr.rel (0) target = $region5
    $region4: #{tpu_custom_call.1} parent=1 // pred_region
      _
    $region5: #{tpu_custom_call.1} parent=1 // pred_fallthru
      _
    // Predicated region
    $region6: #{tpu_custom_call.1} parent=1 // pred_check
      _
    $region7: #{tpu_custom_call.1} parent=1 // pred_check_branch
      %19 = sbr.rel (0) target = $region9
    $region8: #{tpu_custom_call.1} parent=1 // pred_region
      _
    $region9: #{tpu_custom_call.1} parent=1 // pred_fallthru
      _
    // Predicated region
    $region10: #{tpu_custom_call.1} parent=1 // pred_check
      _
    $region11: #{tpu_custom_call.1} parent=1 // pred_check_branch
      %21 = sbr.rel (0) target = $region13
    $region12: #{tpu_custom_call.1} parent=1 // pred_region
      _
    $region13: #{tpu_custom_call.1} parent=1 // pred_fallthru
      _
    // Predicated region
    $region14: #{tpu_custom_call.1} parent=1 // pred_check
      _
    $region15: #{tpu_custom_call.1} parent=1 // pred_check_branch
      %23 = sbr.rel (0) target = $region17
    $region16: #{tpu_custom_call.1} parent=1 // pred_region
      _
    $region17: #{tpu_custom_call.1} parent=1 // pred_fallthru
      _
    // Predicated region
    $region18: #{tpu_custom_call.1} parent=1 // pred_check
      _
    $region19: #{tpu_custom_call.1} parent=1 // pred_check_branch
      %25 = sbr.rel (0) target = $region21
    $region20: #{tpu_custom_call.1} parent=1 // pred_region
      _
    $region21: #{tpu_custom_call.1} parent=1 // pred_fallthru
      _
    // Predicated region
    $region22: #{tpu_custom_call.1} parent=1 // pred_check
      _
    $region23: #{tpu_custom_call.1} parent=1 // pred_check_branch
      %27 = sbr.rel (0) target = $region25
    $region24: #{tpu_custom_call.1} parent=1 // pred_region
      _
    $region25: #{tpu_custom_call.1} parent=1 // pred_fallthru
      _
    // Predicated region
    $region26: #{tpu_custom_call.1} parent=1 // pred_check
      _
    $region27: #{tpu_custom_call.1} parent=1 // pred_check_branch
      %29 = sbr.rel (0) target = $region29
    $region28: #{tpu_custom_call.1} parent=1 // pred_region
      _
    $region29: #{tpu_custom_call.1} parent=1 // pred_fallthru
      _
    // Predicated region
    $region30: #{tpu_custom_call.1} parent=1 // pred_check
      _
    $region31: #{tpu_custom_call.1} parent=1 // pred_check_branch
      %31 = sbr.rel (0) target = $region33
    $region32: #{tpu_custom_call.1} parent=1 // pred_region
      _
    $region33: #{tpu_custom_call.1} parent=1 // pred_fallthru
      _
    %v32 = vld [vmem:[%s0] sm:$0xff]
    %v33 = vld [vmem:[%s0 + $0x8] sm:$0xff]
    %v34 = vld [vmem:[%s0 + $0x10] sm:$0xff]
    %v35 = vld [vmem:[%s0 + $0x18] sm:$0xff]
    %v36 = vld [vmem:[%s0 + $0x20] sm:$0xff]
    %v37 = vld [vmem:[%s0 + $0x28] sm:$0xff]
    %v38 = vld [vmem:[%s0 + $0x30] sm:$0xff]
    %v39 = vld [vmem:[%s0 + $0x38] sm:$0xff]
    %v40 = vld [vmem:[%s2] sm:$0xff]
    %v41 = vld [vmem:[%s2 + $0x8] sm:$0xff]
    %v42 = vld [vmem:[%s4] sm:$0x1]
    %v44 = vlaneseq
    %v45 = vshrl.u32 %v44, 7
    %v46 = vsub.s32 0, %v45
    %v47 = vrot.slane %v42, %v46
    %vm49 = vcmask 130048
    %v51 = vsel %vm49, %v32, 0
    %v54 = vsel %vm49, %v33, 0
    %v57 = vsel %vm49, %v34, 0
    %v60 = vsel %vm49, %v35, 0
    %v63 = vsel %vm49, %v36, 0
    %v66 = vsel %vm49, %v37, 0
    %v69 = vsel %vm49, %v38, 0
    %v72 = vsel %vm49, %v39, 0
    %74 = vmatprep.subr.mxu0 0.0
    %75 = vmatpush1.msra.mxu0 %v40
    %76 = vmatprep.subr.mxu0 0.0
    %77 = vmatpush1.msra.mxu0 %v41
    %78 = vmatprep.subr.mxu0 0.0
    %79 = vmatpush1.msra.mxu0 0.0
    %80 = vmatprep.subr.mxu0 0.0
    %81 = vmatpush1.msra.mxu0 0.0
    %82 = vmatprep.subr.mxu0 0.0
    %83 = vmatpush1.msra.mxu0 0.0
    %84 = vmatprep.subr.mxu0 0.0
    %85 = vmatpush1.msra.mxu0 0.0
    %86 = vmatprep.subr.mxu0 0.0
    %87 = vmatpush1.msra.mxu0 0.0
    %88 = vmatprep.subr.mxu0 0.0
    %89 = vmatpush1.msra.mxu0 0.0
    %90 = vmatprep.subr.mxu0 0.0
    %91 = vmatpush1.msra.mxu0 0.0
    %92 = vmatprep.subr.mxu0 0.0
    %93 = vmatpush1.msra.mxu0 0.0
    %94 = vmatprep.subr.mxu0 0.0
    %95 = vmatpush1.msra.mxu0 0.0
    %96 = vmatprep.subr.mxu0 0.0
    %97 = vmatpush1.msra.mxu0 0.0
    %98 = vmatprep.subr.mxu0 0.0
    %99 = vmatpush1.msra.mxu0 0.0
    %100 = vmatprep.subr.mxu0 0.0
    %101 = vmatpush1.msra.mxu0 0.0
    %102 = vmatprep.subr.mxu0 0.0
    %103 = vmatpush1.msra.mxu0 0.0
    %104 = vmatprep.subr.mxu0 0.0
    %105 = vmatpush1.msra.mxu0 0.0
    %106 = vmatprep.subr.mxu0 0.0
    %107 = vmatpush1.msra.mxu0 0.0
    %108 = vmatprep.subr.mxu0 0.0
    %109 = vmatpush1.msra.mxu0 0.0
    %110 = vmatprep.subr.mxu0 0.0
    %111 = vmatpush1.msra.mxu0 0.0
    %112 = vmatprep.subr.mxu0 0.0
    %113 = vmatpush1.msra.mxu0 0.0
    %114 = vmatprep.subr.mxu0 0.0
    %115 = vmatpush1.msra.mxu0 0.0
    %116 = vmatprep.subr.mxu0 0.0
    %117 = vmatpush1.msra.mxu0 0.0
    %118 = vmatprep.subr.mxu0 0.0
    %119 = vmatpush1.msra.mxu0 0.0
    %120 = vmatprep.subr.mxu0 0.0
    %121 = vmatpush1.msra.mxu0 0.0
    %122 = vmatprep.subr.mxu0 0.0
    %123 = vmatpush1.msra.mxu0 0.0
    %124 = vmatprep.subr.mxu0 0.0
    %125 = vmatpush1.msra.mxu0 0.0
    %126 = vmatprep.subr.mxu0 0.0
    %127 = vmatpush1.msra.mxu0 0.0
    %128 = vmatprep.subr.mxu0 0.0
    %129 = vmatpush1.msra.mxu0 0.0
    %130 = vmatprep.subr.mxu0 0.0
    %131 = vmatpush1.msra.mxu0 0.0
    %132 = vmatprep.subr.mxu0 0.0
    %133 = vmatpush1.msra.mxu0 0.0
    %134 = vmatprep.subr.mxu0 0.0
    %135 = vmatpush1.msra.mxu0 0.0
    %136 = vmatprep.subr.mxu0 0.0
    %137 = vmatpush1.msra.mxu0 0.0
    %138 = vmatprep.mubr.f32.mxu0 0.0
    %139 = vmatmul.mubr.f32.gmra.mrb[0].mxu0 %v51
    %v140 = vpop.f32.mrb[0].mxu0
    %v141 = vadd.f32 %v47, %v140
    %v142 = vpop.f32.mrb[0].mxu0
    %143 = vmatprep.mubr.f32.mxu0 0.0
    %144 = vmatmul.mubr.f32.gmra.mrb[0].mxu0 %v54
    %v145 = vpop.f32.mrb[0].mxu0
    %v146 = vadd.f32 %v47, %v145
    %v147 = vpop.f32.mrb[0].mxu0
    %148 = vmatprep.mubr.f32.mxu0 0.0
    %149 = vmatmul.mubr.f32.gmra.mrb[0].mxu0 %v57
    %v150 = vpop.f32.mrb[0].mxu0
    %v151 = vadd.f32 %v47, %v150
    %v152 = vpop.f32.mrb[0].mxu0
    %153 = vmatprep.mubr.f32.mxu0 0.0
    %154 = vmatmul.mubr.f32.gmra.mrb[0].mxu0 %v60
    %v155 = vpop.f32.mrb[0].mxu0
    %v156 = vadd.f32 %v47, %v155
    %v157 = vpop.f32.mrb[0].mxu0
    %158 = vmatprep.mubr.f32.mxu0 0.0
    %159 = vmatmul.mubr.f32.gmra.mrb[0].mxu0 %v63
    %v160 = vpop.f32.mrb[0].mxu0
    %v161 = vadd.f32 %v47, %v160
    %v162 = vpop.f32.mrb[0].mxu0
    %163 = vmatprep.mubr.f32.mxu0 0.0
    %164 = vmatmul.mubr.f32.gmra.mrb[0].mxu0 %v66
    %v165 = vpop.f32.mrb[0].mxu0
    %v166 = vadd.f32 %v47, %v165
    %v167 = vpop.f32.mrb[0].mxu0
    %168 = vmatprep.mubr.f32.mxu0 0.0
    %169 = vmatmul.mubr.f32.gmra.mrb[0].mxu0 %v69
    %v170 = vpop.f32.mrb[0].mxu0
    %v171 = vadd.f32 %v47, %v170
    %v172 = vpop.f32.mrb[0].mxu0
    %173 = vmatprep.mubr.f32.mxu0 0.0
    %174 = vmatmul.mubr.f32.gmra.mrb[0].mxu0 %v72
    %v175 = vpop.f32.mrb[0].mxu0
    %v176 = vadd.f32 %v47, %v175
    %v177 = vpop.f32.mrb[0].mxu0
    %178 = vdwg.mxu0
    %vm179 = vcmask 785408
    %180 = vst.msk [vmem:[#allocation3] sm:$0xff] %vm179, %v141
    %181 = vst.msk [vmem:[#allocation3 + $0x8] sm:$0xff] %vm179, %v146
    %182 = vst.msk [vmem:[#allocation3 + $0x10] sm:$0xff] %vm179, %v151
    %183 = vst.msk [vmem:[#allocation3 + $0x18] sm:$0xff] %vm179, %v156
    %184 = vst.msk [vmem:[#allocation3 + $0x20] sm:$0xff] %vm179, %v161
    %185 = vst.msk [vmem:[#allocation3 + $0x28] sm:$0xff] %vm179, %v166
    %186 = vst.msk [vmem:[#allocation3 + $0x30] sm:$0xff] %vm179, %v171
    %187 = vst.msk [vmem:[#allocation3 + $0x38] sm:$0xff] %vm179, %v176
    %v188 = vld [vmem:[%s1] sm:$0xff]
    %vm189 = vcmask 261120
    %190 = vst.msk [vmem:[#allocation2] sm:$0xff] %vm189, %v188
    %v191 = vld [vmem:[%s5] sm:$0x1]
    %v193 = vlaneseq
    %v194 = vshrl.u32 %v193, 7
    %v195 = vsub.s32 0, %v194
    %v196 = vrot.slane %v191, %v195
    %v197 = vld [vmem:[#allocation2] sm:$0xff]
    %v198 = vld [vmem:[#allocation3] sm:$0xff]
    %v199 = vld [vmem:[%s3] sm:$0xff]
    %v200 = vld [vmem:[%s3 + $0x8] sm:$0xff]
    %v201 = vld [vmem:[%s3 + $0x10] sm:$0xff]
    %v202 = vld [vmem:[%s3 + $0x18] sm:$0xff]
    %v204 = vsel %vm189, %v197, 0
    %206 = vmatprep.subr.mxu0 0.0
    %207 = vmatpush1.msra.mxu0 %v199
    %208 = vmatprep.subr.mxu0 0.0
    %209 = vmatpush1.msra.mxu0 %v200
    %210 = vmatprep.subr.mxu0 0.0
    %211 = vmatpush1.msra.mxu0 %v201
    %212 = vmatprep.subr.mxu0 0.0
    %213 = vmatpush1.msra.mxu0 %v202
    %214 = vmatprep.subr.mxu0 0.0
    %215 = vmatpush1.msra.mxu0 0.0
    %216 = vmatprep.subr.mxu0 0.0
    %217 = vmatpush1.msra.mxu0 0.0
    %218 = vmatprep.subr.mxu0 0.0
    %219 = vmatpush1.msra.mxu0 0.0
    %220 = vmatprep.subr.mxu0 0.0
    %221 = vmatpush1.msra.mxu0 0.0
    %222 = vmatprep.subr.mxu0 0.0
    %223 = vmatpush1.msra.mxu0 0.0
    %224 = vmatprep.subr.mxu0 0.0
    %225 = vmatpush1.msra.mxu0 0.0
    %226 = vmatprep.subr.mxu0 0.0
    %227 = vmatpush1.msra.mxu0 0.0
    %228 = vmatprep.subr.mxu0 0.0
    %229 = vmatpush1.msra.mxu0 0.0
    %230 = vmatprep.subr.mxu0 0.0
    %231 = vmatpush1.msra.mxu0 0.0
    %232 = vmatprep.subr.mxu0 0.0
    %233 = vmatpush1.msra.mxu0 0.0
    %234 = vmatprep.subr.mxu0 0.0
    %235 = vmatpush1.msra.mxu0 0.0
    %236 = vmatprep.subr.mxu0 0.0
    %237 = vmatpush1.msra.mxu0 0.0
    %238 = vmatprep.subr.mxu0 0.0
    %239 = vmatpush1.msra.mxu0 0.0
    %240 = vmatprep.subr.mxu0 0.0
    %241 = vmatpush1.msra.mxu0 0.0
    %242 = vmatprep.subr.mxu0 0.0
    %243 = vmatpush1.msra.mxu0 0.0
    %244 = vmatprep.subr.mxu0 0.0
    %245 = vmatpush1.msra.mxu0 0.0
    %246 = vmatprep.subr.mxu0 0.0
    %247 = vmatpush1.msra.mxu0 0.0
    %248 = vmatprep.subr.mxu0 0.0
    %249 = vmatpush1.msra.mxu0 0.0
    %250 = vmatprep.subr.mxu0 0.0
    %251 = vmatpush1.msra.mxu0 0.0
    %252 = vmatprep.subr.mxu0 0.0
    %253 = vmatpush1.msra.mxu0 0.0
    %254 = vmatprep.subr.mxu0 0.0
    %255 = vmatpush1.msra.mxu0 0.0
    %256 = vmatprep.subr.mxu0 0.0
    %257 = vmatpush1.msra.mxu0 0.0
    %258 = vmatprep.subr.mxu0 0.0
    %259 = vmatpush1.msra.mxu0 0.0
    %260 = vmatprep.subr.mxu0 0.0
    %261 = vmatpush1.msra.mxu0 0.0
    %262 = vmatprep.subr.mxu0 0.0
    %263 = vmatpush1.msra.mxu0 0.0
    %264 = vmatprep.subr.mxu0 0.0
    %265 = vmatpush1.msra.mxu0 0.0
    %266 = vmatprep.subr.mxu0 0.0
    %267 = vmatpush1.msra.mxu0 0.0
    %268 = vmatprep.subr.mxu0 0.0
    %269 = vmatpush1.msra.mxu0 0.0
    %270 = vmatprep.mubr.f32.mxu0 0.0
    %271 = vmatmul.mubr.f32.gmra.mrb[0].mxu0 %v204
    %v272 = vpop.f32.mrb[0].mxu0
    %v273 = vadd.f32 0.0, %v272
    %v274 = vpop.f32.mrb[0].mxu0
    %275 = vdwg.mxu0
    %v276 = vadd.f32 %v198, %v273
    %v277 = vsub.f32 0.0, %v276
    %v278 = vmul.f32 %v277, 1.442695
    %v279 = vpow.pop %v278
    %v280 = vadd.f32 %v279, 1.0
    %v281 = vrcp.pop %v280
    %v282 = vmul.f32 1.0, %v281
    %283 = vrot.lane.b32.xlu0 %v196, 64
    %v284 = vpop.permute.xlu0 %283
    %v286 = vadd.f32 %v273, %v284
    %288 = vrot.lane.b32.xlu0 %v286, 64
    %v289 = vpop.permute.xlu0 %288
    %v291 = vmul.f32 %v282, %v289
    %293 = vrot.lane.b32.xlu0 %v291, 64
    %v294 = vpop.permute.xlu0 %293
    %v296 = vadd.f32 %v198, %v294
    %v297 = vtanh.pop %v296
    %v298 = vsub.f32 1.0, %v282
    %300 = vrot.lane.b32.xlu0 %v297, 96
    %v301 = vpop.permute.xlu0 %300
    %v303 = vmul.f32 %v298, %v301
    %304 = vrot.lane.b32.xlu0 %v197, 32
    %v305 = vpop.permute.xlu0 %304
    %v307 = vmul.f32 %v282, %v305
    %v308 = vadd.f32 %v303, %v307
    %310 = vrot.lane.b32.xlu0 %v308, 96
    %v311 = vpop.permute.xlu0 %310
    %313 = vst.msk [vmem:[#allocation2] sm:$0xff] %vm189, %v311
    %314 = vst.msk [vmem:[#allocation4] sm:$0xff] %vm189, %v311
    %v315 = vld [vmem:[#allocation2] sm:$0xff]
    %s316 = scalar_lea.vmem [#allocation3], 8
    %v317 = vld [vmem:[%s316] sm:$0xff]
    %v318 = vld [vmem:[%s3] sm:$0xff]
    %v319 = vld [vmem:[%s3 + $0x8] sm:$0xff]
    %v320 = vld [vmem:[%s3 + $0x10] sm:$0xff]
    %v321 = vld [vmem:[%s3 + $0x18] sm:$0xff]
    %v323 = vsel %vm189, %v315, 0
    %325 = vmatprep.subr.mxu0 0.0
    %326 = vmatpush1.msra.mxu0 %v318
    %327 = vmatprep.subr.mxu0 0.0
    %328 = vmatpush1.msra.mxu0 %v319
    %329 = vmatprep.subr.mxu0 0.0
    %330 = vmatpush1.msra.mxu0 %v320
    %331 = vmatprep.subr.mxu0 0.0
    %332 = vmatpush1.msra.mxu0 %v321
    %333 = vmatprep.subr.mxu0 0.0
    %334 = vmatpush1.msra.mxu0 0.0
    %335 = vmatprep.subr.mxu0 0.0
    %336 = vmatpush1.msra.mxu0 0.0
    %337 = vmatprep.subr.mxu0 0.0
    %338 = vmatpush1.msra.mxu0 0.0
    %339 = vmatprep.subr.mxu0 0.0
    %340 = vmatpush1.msra.mxu0 0.0
    %341 = vmatprep.subr.mxu0 0.0
    %342 = vmatpush1.msra.mxu0 0.0
    %343 = vmatprep.subr.mxu0 0.0
    %344 = vmatpush1.msra.mxu0 0.0
    %345 = vmatprep.subr.mxu0 0.0
    %346 = vmatpush1.msra.mxu0 0.0
    %347 = vmatprep.subr.mxu0 0.0
    %348 = vmatpush1.msra.mxu0 0.0
    %349 = vmatprep.subr.mxu0 0.0
    %350 = vmatpush1.msra.mxu0 0.0
    %351 = vmatprep.subr.mxu0 0.0
    %352 = vmatpush1.msra.mxu0 0.0
    %353 = vmatprep.subr.mxu0 0.0
    %354 = vmatpush1.msra.mxu0 0.0
    %355 = vmatprep.subr.mxu0 0.0
    %356 = vmatpush1.msra.mxu0 0.0
    %357 = vmatprep.subr.mxu0 0.0
    %358 = vmatpush1.msra.mxu0 0.0
    %359 = vmatprep.subr.mxu0 0.0
    %360 = vmatpush1.msra.mxu0 0.0
    %361 = vmatprep.subr.mxu0 0.0
    %362 = vmatpush1.msra.mxu0 0.0
    %363 = vmatprep.subr.mxu0 0.0
    %364 = vmatpush1.msra.mxu0 0.0
    %365 = vmatprep.subr.mxu0 0.0
    %366 = vmatpush1.msra.mxu0 0.0
    %367 = vmatprep.subr.mxu0 0.0
    %368 = vmatpush1.msra.mxu0 0.0
    %369 = vmatprep.subr.mxu0 0.0
    %370 = vmatpush1.msra.mxu0 0.0
    %371 = vmatprep.subr.mxu0 0.0
    %372 = vmatpush1.msra.mxu0 0.0
    %373 = vmatprep.subr.mxu0 0.0
    %374 = vmatpush1.msra.mxu0 0.0
    %375 = vmatprep.subr.mxu0 0.0
    %376 = vmatpush1.msra.mxu0 0.0
    %377 = vmatprep.subr.mxu0 0.0
    %378 = vmatpush1.msra.mxu0 0.0
    %379 = vmatprep.subr.mxu0 0.0
    %380 = vmatpush1.msra.mxu0 0.0
    %381 = vmatprep.subr.mxu0 0.0
    %382 = vmatpush1.msra.mxu0 0.0
    %383 = vmatprep.subr.mxu0 0.0
    %384 = vmatpush1.msra.mxu0 0.0
    %385 = vmatprep.subr.mxu0 0.0
    %386 = vmatpush1.msra.mxu0 0.0
    %387 = vmatprep.subr.mxu0 0.0
    %388 = vmatpush1.msra.mxu0 0.0
    %389 = vmatprep.mubr.f32.mxu0 0.0
    %390 = vmatmul.mubr.f32.gmra.mrb[0].mxu0 %v323
    %v391 = vpop.f32.mrb[0].mxu0
    %v392 = vadd.f32 0.0, %v391
    %v393 = vpop.f32.mrb[0].mxu0
    %394 = vdwg.mxu0
    %v395 = vadd.f32 %v317, %v392
    %v396 = vsub.f32 0.0, %v395
    %v397 = vmul.f32 %v396, 1.442695
    %v398 = vpow.pop %v397
    %v399 = vadd.f32 %v398, 1.0
    %v400 = vrcp.pop %v399
    %v401 = vmul.f32 1.0, %v400
    %v402 = vadd.f32 %v392, %v284
    %404 = vrot.lane.b32.xlu0 %v402, 64
    %v405 = vpop.permute.xlu0 %404
    %v407 = vmul.f32 %v401, %v405
    %409 = vrot.lane.b32.xlu0 %v407, 64
    %v410 = vpop.permute.xlu0 %409
    %v412 = vadd.f32 %v317, %v410
    %v413 = vtanh.pop %v412
    %v414 = vsub.f32 1.0, %v401
    %416 = vrot.lane.b32.xlu0 %v413, 96
    %v417 = vpop.permute.xlu0 %416
    %v419 = vmul.f32 %v414, %v417
    %420 = vrot.lane.b32.xlu0 %v315, 32
    %v421 = vpop.permute.xlu0 %420
    %v423 = vmul.f32 %v401, %v421
    %v424 = vadd.f32 %v419, %v423
    %426 = vrot.lane.b32.xlu0 %v424, 96
    %v427 = vpop.permute.xlu0 %426
    %429 = vst.msk [vmem:[#allocation2] sm:$0xff] %vm189, %v427
    %s430 = scalar_lea.vmem [#allocation4], 8
    %431 = vst.msk [vmem:[%s430] sm:$0xff] %vm189, %v427
    %v432 = vld [vmem:[#allocation2] sm:$0xff]
    %s433 = scalar_lea.vmem [#allocation3], 16
    %v434 = vld [vmem:[%s433] sm:$0xff]
    %v435 = vld [vmem:[%s3] sm:$0xff]
    %v436 = vld [vmem:[%s3 + $0x8] sm:$0xff]
    %v437 = vld [vmem:[%s3 + $0x10] sm:$0xff]
    %v438 = vld [vmem:[%s3 + $0x18] sm:$0xff]
    %v440 = vsel %vm189, %v432, 0
    %442 = vmatprep.subr.mxu0 0.0
    %443 = vmatpush1.msra.mxu0 %v435
    %444 = vmatprep.subr.mxu0 0.0
    %445 = vmatpush1.msra.mxu0 %v436
    %446 = vmatprep.subr.mxu0 0.0
    %447 = vmatpush1.msra.mxu0 %v437
    %448 = vmatprep.subr.mxu0 0.0
    %449 = vmatpush1.msra.mxu0 %v438
    %450 = vmatprep.subr.mxu0 0.0
    %451 = vmatpush1.msra.mxu0 0.0
    %452 = vmatprep.subr.mxu0 0.0
    %453 = vmatpush1.msra.mxu0 0.0
    %454 = vmatprep.subr.mxu0 0.0
    %455 = vmatpush1.msra.mxu0 0.0
    %456 = vmatprep.subr.mxu0 0.0
    %457 = vmatpush1.msra.mxu0 0.0
    %458 = vmatprep.subr.mxu0 0.0
    %459 = vmatpush1.msra.mxu0 0.0
    %460 = vmatprep.subr.mxu0 0.0
    %461 = vmatpush1.msra.mxu0 0.0
    %462 = vmatprep.subr.mxu0 0.0
    %463 = vmatpush1.msra.mxu0 0.0
    %464 = vmatprep.subr.mxu0 0.0
    %465 = vmatpush1.msra.mxu0 0.0
    %466 = vmatprep.subr.mxu0 0.0
    %467 = vmatpush1.msra.mxu0 0.0
    %468 = vmatprep.subr.mxu0 0.0
    %469 = vmatpush1.msra.mxu0 0.0
    %470 = vmatprep.subr.mxu0 0.0
    %471 = vmatpush1.msra.mxu0 0.0
    %472 = vmatprep.subr.mxu0 0.0
    %473 = vmatpush1.msra.mxu0 0.0
    %474 = vmatprep.subr.mxu0 0.0
    %475 = vmatpush1.msra.mxu0 0.0
    %476 = vmatprep.subr.mxu0 0.0
    %477 = vmatpush1.msra.mxu0 0.0
    %478 = vmatprep.subr.mxu0 0.0
    %479 = vmatpush1.msra.mxu0 0.0
    %480 = vmatprep.subr.mxu0 0.0
    %481 = vmatpush1.msra.mxu0 0.0
    %482 = vmatprep.subr.mxu0 0.0
    %483 = vmatpush1.msra.mxu0 0.0
    %484 = vmatprep.subr.mxu0 0.0
    %485 = vmatpush1.msra.mxu0 0.0
    %486 = vmatprep.subr.mxu0 0.0
    %487 = vmatpush1.msra.mxu0 0.0
    %488 = vmatprep.subr.mxu0 0.0
    %489 = vmatpush1.msra.mxu0 0.0
    %490 = vmatprep.subr.mxu0 0.0
    %491 = vmatpush1.msra.mxu0 0.0
    %492 = vmatprep.subr.mxu0 0.0
    %493 = vmatpush1.msra.mxu0 0.0
    %494 = vmatprep.subr.mxu0 0.0
    %495 = vmatpush1.msra.mxu0 0.0
    %496 = vmatprep.subr.mxu0 0.0
    %497 = vmatpush1.msra.mxu0 0.0
    %498 = vmatprep.subr.mxu0 0.0
    %499 = vmatpush1.msra.mxu0 0.0
    %500 = vmatprep.subr.mxu0 0.0
    %501 = vmatpush1.msra.mxu0 0.0
    %502 = vmatprep.subr.mxu0 0.0
    %503 = vmatpush1.msra.mxu0 0.0
    %504 = vmatprep.subr.mxu0 0.0
    %505 = vmatpush1.msra.mxu0 0.0
    %506 = vmatprep.mubr.f32.mxu0 0.0
    %507 = vmatmul.mubr.f32.gmra.mrb[0].mxu0 %v440
    %v508 = vpop.f32.mrb[0].mxu0
    %v509 = vadd.f32 0.0, %v508
    %v510 = vpop.f32.mrb[0].mxu0
    %511 = vdwg.mxu0
    %v512 = vadd.f32 %v434, %v509
    %v513 = vsub.f32 0.0, %v512
    %v514 = vmul.f32 %v513, 1.442695
    %v515 = vpow.pop %v514
    %v516 = vadd.f32 %v515, 1.0
    %v517 = vrcp.pop %v516
    %v518 = vmul.f32 1.0, %v517
    %v519 = vadd.f32 %v509, %v284
    %521 = vrot.lane.b32.xlu0 %v519, 64
    %v522 = vpop.permute.xlu0 %521
    %v524 = vmul.f32 %v518, %v522
    %526 = vrot.lane.b32.xlu0 %v524, 64
    %v527 = vpop.permute.xlu0 %526
    %v529 = vadd.f32 %v434, %v527
    %v530 = vtanh.pop %v529
    %v531 = vsub.f32 1.0, %v518
    %533 = vrot.lane.b32.xlu0 %v530, 96
    %v534 = vpop.permute.xlu0 %533
    %v536 = vmul.f32 %v531, %v534
    %537 = vrot.lane.b32.xlu0 %v432, 32
    %v538 = vpop.permute.xlu0 %537
    %v540 = vmul.f32 %v518, %v538
    %v541 = vadd.f32 %v536, %v540
    %543 = vrot.lane.b32.xlu0 %v541, 96
    %v544 = vpop.permute.xlu0 %543
    %546 = vst.msk [vmem:[#allocation2] sm:$0xff] %vm189, %v544
    %s547 = scalar_lea.vmem [#allocation4], 16
    %548 = vst.msk [vmem:[%s547] sm:$0xff] %vm189, %v544
    %v549 = vld [vmem:[#allocation2] sm:$0xff]
    %s550 = scalar_lea.vmem [#allocation3], 24
    %v551 = vld [vmem:[%s550] sm:$0xff]
    %v552 = vld [vmem:[%s3] sm:$0xff]
    %v553 = vld [vmem:[%s3 + $0x8] sm:$0xff]
    %v554 = vld [vmem:[%s3 + $0x10] sm:$0xff]
    %v555 = vld [vmem:[%s3 + $0x18] sm:$0xff]
    %v557 = vsel %vm189, %v549, 0
    %559 = vmatprep.subr.mxu0 0.0
    %560 = vmatpush1.msra.mxu0 %v552
    %561 = vmatprep.subr.mxu0 0.0
    %562 = vmatpush1.msra.mxu0 %v553
    %563 = vmatprep.subr.mxu0 0.0
    %564 = vmatpush1.msra.mxu0 %v554
    %565 = vmatprep.subr.mxu0 0.0
    %566 = vmatpush1.msra.mxu0 %v555
    %567 = vmatprep.subr.mxu0 0.0
    %568 = vmatpush1.msra.mxu0 0.0
    %569 = vmatprep.subr.mxu0 0.0
    %570 = vmatpush1.msra.mxu0 0.0
    %571 = vmatprep.subr.mxu0 0.0
    %572 = vmatpush1.msra.mxu0 0.0
    %573 = vmatprep.subr.mxu0 0.0
    %574 = vmatpush1.msra.mxu0 0.0
    %575 = vmatprep.subr.mxu0 0.0
    %576 = vmatpush1.msra.mxu0 0.0
    %577 = vmatprep.subr.mxu0 0.0
    %578 = vmatpush1.msra.mxu0 0.0
    %579 = vmatprep.subr.mxu0 0.0
    %580 = vmatpush1.msra.mxu0 0.0
    %581 = vmatprep.subr.mxu0 0.0
    %582 = vmatpush1.msra.mxu0 0.0
    %583 = vmatprep.subr.mxu0 0.0
    %584 = vmatpush1.msra.mxu0 0.0
    %585 = vmatprep.subr.mxu0 0.0
    %586 = vmatpush1.msra.mxu0 0.0
    %587 = vmatprep.subr.mxu0 0.0
    %588 = vmatpush1.msra.mxu0 0.0
    %589 = vmatprep.subr.mxu0 0.0
    %590 = vmatpush1.msra.mxu0 0.0
    %591 = vmatprep.subr.mxu0 0.0
    %592 = vmatpush1.msra.mxu0 0.0
    %593 = vmatprep.subr.mxu0 0.0
    %594 = vmatpush1.msra.mxu0 0.0
    %595 = vmatprep.subr.mxu0 0.0
    %596 = vmatpush1.msra.mxu0 0.0
    %597 = vmatprep.subr.mxu0 0.0
    %598 = vmatpush1.msra.mxu0 0.0
    %599 = vmatprep.subr.mxu0 0.0
    %600 = vmatpush1.msra.mxu0 0.0
    %601 = vmatprep.subr.mxu0 0.0
    %602 = vmatpush1.msra.mxu0 0.0
    %603 = vmatprep.subr.mxu0 0.0
    %604 = vmatpush1.msra.mxu0 0.0
    %605 = vmatprep.subr.mxu0 0.0
    %606 = vmatpush1.msra.mxu0 0.0
    %607 = vmatprep.subr.mxu0 0.0
    %608 = vmatpush1.msra.mxu0 0.0
    %609 = vmatprep.subr.mxu0 0.0
    %610 = vmatpush1.msra.mxu0 0.0
    %611 = vmatprep.subr.mxu0 0.0
    %612 = vmatpush1.msra.mxu0 0.0
    %613 = vmatprep.subr.mxu0 0.0
    %614 = vmatpush1.msra.mxu0 0.0
    %615 = vmatprep.subr.mxu0 0.0
    %616 = vmatpush1.msra.mxu0 0.0
    %617 = vmatprep.subr.mxu0 0.0
    %618 = vmatpush1.msra.mxu0 0.0
    %619 = vmatprep.subr.mxu0 0.0
    %620 = vmatpush1.msra.mxu0 0.0
    %621 = vmatprep.subr.mxu0 0.0
    %622 = vmatpush1.msra.mxu0 0.0
    %623 = vmatprep.mubr.f32.mxu0 0.0
    %624 = vmatmul.mubr.f32.gmra.mrb[0].mxu0 %v557
    %v625 = vpop.f32.mrb[0].mxu0
    %v626 = vadd.f32 0.0, %v625
    %v627 = vpop.f32.mrb[0].mxu0
    %628 = vdwg.mxu0
    %v629 = vadd.f32 %v551, %v626
    %v630 = vsub.f32 0.0, %v629
    %v631 = vmul.f32 %v630, 1.442695
    %v632 = vpow.pop %v631
    %v633 = vadd.f32 %v632, 1.0
    %v634 = vrcp.pop %v633
    %v635 = vmul.f32 1.0, %v634
    %v636 = vadd.f32 %v626, %v284
    %638 = vrot.lane.b32.xlu0 %v636, 64
    %v639 = vpop.permute.xlu0 %638
    %v641 = vmul.f32 %v635, %v639
    %643 = vrot.lane.b32.xlu0 %v641, 64
    %v644 = vpop.permute.xlu0 %643
    %v646 = vadd.f32 %v551, %v644
    %v647 = vtanh.pop %v646
    %v648 = vsub.f32 1.0, %v635
    %650 = vrot.lane.b32.xlu0 %v647, 96
    %v651 = vpop.permute.xlu0 %650
    %v653 = vmul.f32 %v648, %v651
    %654 = vrot.lane.b32.xlu0 %v549, 32
    %v655 = vpop.permute.xlu0 %654
    %v657 = vmul.f32 %v635, %v655
    %v658 = vadd.f32 %v653, %v657
    %660 = vrot.lane.b32.xlu0 %v658, 96
    %v661 = vpop.permute.xlu0 %660
    %663 = vst.msk [vmem:[#allocation2] sm:$0xff] %vm189, %v661
    %s664 = scalar_lea.vmem [#allocation4], 24
    %665 = vst.msk [vmem:[%s664] sm:$0xff] %vm189, %v661
    %v666 = vld [vmem:[#allocation2] sm:$0xff]
    %s667 = scalar_lea.vmem [#allocation3], 32
    %v668 = vld [vmem:[%s667] sm:$0xff]
    %v669 = vld [vmem:[%s3] sm:$0xff]
    %v670 = vld [vmem:[%s3 + $0x8] sm:$0xff]
    %v671 = vld [vmem:[%s3 + $0x10] sm:$0xff]
    %v672 = vld [vmem:[%s3 + $0x18] sm:$0xff]
    %v674 = vsel %vm189, %v666, 0
    %676 = vmatprep.subr.mxu0 0.0
    %677 = vmatpush1.msra.mxu0 %v669
    %678 = vmatprep.subr.mxu0 0.0
    %679 = vmatpush1.msra.mxu0 %v670
    %680 = vmatprep.subr.mxu0 0.0
    %681 = vmatpush1.msra.mxu0 %v671
    %682 = vmatprep.subr.mxu0 0.0
    %683 = vmatpush1.msra.mxu0 %v672
    %684 = vmatprep.subr.mxu0 0.0
    %685 = vmatpush1.msra.mxu0 0.0
    %686 = vmatprep.subr.mxu0 0.0
    %687 = vmatpush1.msra.mxu0 0.0
    %688 = vmatprep.subr.mxu0 0.0
    %689 = vmatpush1.msra.mxu0 0.0
    %690 = vmatprep.subr.mxu0 0.0
    %691 = vmatpush1.msra.mxu0 0.0
    %692 = vmatprep.subr.mxu0 0.0
    %693 = vmatpush1.msra.mxu0 0.0
    %694 = vmatprep.subr.mxu0 0.0
    %695 = vmatpush1.msra.mxu0 0.0
    %696 = vmatprep.subr.mxu0 0.0
    %697 = vmatpush1.msra.mxu0 0.0
    %698 = vmatprep.subr.mxu0 0.0
    %699 = vmatpush1.msra.mxu0 0.0
    %700 = vmatprep.subr.mxu0 0.0
    %701 = vmatpush1.msra.mxu0 0.0
    %702 = vmatprep.subr.mxu0 0.0
    %703 = vmatpush1.msra.mxu0 0.0
    %704 = vmatprep.subr.mxu0 0.0
    %705 = vmatpush1.msra.mxu0 0.0
    %706 = vmatprep.subr.mxu0 0.0
    %707 = vmatpush1.msra.mxu0 0.0
    %708 = vmatprep.subr.mxu0 0.0
    %709 = vmatpush1.msra.mxu0 0.0
    %710 = vmatprep.subr.mxu0 0.0
    %711 = vmatpush1.msra.mxu0 0.0
    %712 = vmatprep.subr.mxu0 0.0
    %713 = vmatpush1.msra.mxu0 0.0
    %714 = vmatprep.subr.mxu0 0.0
    %715 = vmatpush1.msra.mxu0 0.0
    %716 = vmatprep.subr.mxu0 0.0
    %717 = vmatpush1.msra.mxu0 0.0
    %718 = vmatprep.subr.mxu0 0.0
    %719 = vmatpush1.msra.mxu0 0.0
    %720 = vmatprep.subr.mxu0 0.0
    %721 = vmatpush1.msra.mxu0 0.0
    %722 = vmatprep.subr.mxu0 0.0
    %723 = vmatpush1.msra.mxu0 0.0
    %724 = vmatprep.subr.mxu0 0.0
    %725 = vmatpush1.msra.mxu0 0.0
    %726 = vmatprep.subr.mxu0 0.0
    %727 = vmatpush1.msra.mxu0 0.0
    %728 = vmatprep.subr.mxu0 0.0
    %729 = vmatpush1.msra.mxu0 0.0
    %730 = vmatprep.subr.mxu0 0.0
    %731 = vmatpush1.msra.mxu0 0.0
    %732 = vmatprep.subr.mxu0 0.0
    %733 = vmatpush1.msra.mxu0 0.0
    %734 = vmatprep.subr.mxu0 0.0
    %735 = vmatpush1.msra.mxu0 0.0
    %736 = vmatprep.subr.mxu0 0.0
    %737 = vmatpush1.msra.mxu0 0.0
    %738 = vmatprep.subr.mxu0 0.0
    %739 = vmatpush1.msra.mxu0 0.0
    %740 = vmatprep.mubr.f32.mxu0 0.0
    %741 = vmatmul.mubr.f32.gmra.mrb[0].mxu0 %v674
    %v742 = vpop.f32.mrb[0].mxu0
    %v743 = vadd.f32 0.0, %v742
    %v744 = vpop.f32.mrb[0].mxu0
    %745 = vdwg.mxu0
    %v746 = vadd.f32 %v668, %v743
    %v747 = vsub.f32 0.0, %v746
    %v748 = vmul.f32 %v747, 1.442695
    %v749 = vpow.pop %v748
    %v750 = vadd.f32 %v749, 1.0
    %v751 = vrcp.pop %v750
    %v752 = vmul.f32 1.0, %v751
    %v753 = vadd.f32 %v743, %v284
    %755 = vrot.lane.b32.xlu0 %v753, 64
    %v756 = vpop.permute.xlu0 %755
    %v758 = vmul.f32 %v752, %v756
    %760 = vrot.lane.b32.xlu0 %v758, 64
    %v761 = vpop.permute.xlu0 %760
    %v763 = vadd.f32 %v668, %v761
    %v764 = vtanh.pop %v763
    %v765 = vsub.f32 1.0, %v752
    %767 = vrot.lane.b32.xlu0 %v764, 96
    %v768 = vpop.permute.xlu0 %767
    %v770 = vmul.f32 %v765, %v768
    %771 = vrot.lane.b32.xlu0 %v666, 32
    %v772 = vpop.permute.xlu0 %771
    %v774 = vmul.f32 %v752, %v772
    %v775 = vadd.f32 %v770, %v774
    %777 = vrot.lane.b32.xlu0 %v775, 96
    %v778 = vpop.permute.xlu0 %777
    %780 = vst.msk [vmem:[#allocation2] sm:$0xff] %vm189, %v778
    %s781 = scalar_lea.vmem [#allocation4], 32
    %782 = vst.msk [vmem:[%s781] sm:$0xff] %vm189, %v778
    %v783 = vld [vmem:[#allocation2] sm:$0xff]
    %s784 = scalar_lea.vmem [#allocation3], 40
    %v785 = vld [vmem:[%s784] sm:$0xff]
    %v786 = vld [vmem:[%s3] sm:$0xff]
    %v787 = vld [vmem:[%s3 + $0x8] sm:$0xff]
    %v788 = vld [vmem:[%s3 + $0x10] sm:$0xff]
    %v789 = vld [vmem:[%s3 + $0x18] sm:$0xff]
    %v791 = vsel %vm189, %v783, 0
    %793 = vmatprep.subr.mxu0 0.0
    %794 = vmatpush1.msra.mxu0 %v786
    %795 = vmatprep.subr.mxu0 0.0
    %796 = vmatpush1.msra.mxu0 %v787
    %797 = vmatprep.subr.mxu0 0.0
    %798 = vmatpush1.msra.mxu0 %v788
    %799 = vmatprep.subr.mxu0 0.0
    %800 = vmatpush1.msra.mxu0 %v789
    %801 = vmatprep.subr.mxu0 0.0
    %802 = vmatpush1.msra.mxu0 0.0
    %803 = vmatprep.subr.mxu0 0.0
    %804 = vmatpush1.msra.mxu0 0.0
    %805 = vmatprep.subr.mxu0 0.0
    %806 = vmatpush1.msra.mxu0 0.0
    %807 = vmatprep.subr.mxu0 0.0
    %808 = vmatpush1.msra.mxu0 0.0
    %809 = vmatprep.subr.mxu0 0.0
    %810 = vmatpush1.msra.mxu0 0.0
    %811 = vmatprep.subr.mxu0 0.0
    %812 = vmatpush1.msra.mxu0 0.0
    %813 = vmatprep.subr.mxu0 0.0
    %814 = vmatpush1.msra.mxu0 0.0
    %815 = vmatprep.subr.mxu0 0.0
    %816 = vmatpush1.msra.mxu0 0.0
    %817 = vmatprep.subr.mxu0 0.0
    %818 = vmatpush1.msra.mxu0 0.0
    %819 = vmatprep.subr.mxu0 0.0
    %820 = vmatpush1.msra.mxu0 0.0
    %821 = vmatprep.subr.mxu0 0.0
    %822 = vmatpush1.msra.mxu0 0.0
    %823 = vmatprep.subr.mxu0 0.0
    %824 = vmatpush1.msra.mxu0 0.0
    %825 = vmatprep.subr.mxu0 0.0
    %826 = vmatpush1.msra.mxu0 0.0
    %827 = vmatprep.subr.mxu0 0.0
    %828 = vmatpush1.msra.mxu0 0.0
    %829 = vmatprep.subr.mxu0 0.0
    %830 = vmatpush1.msra.mxu0 0.0
    %831 = vmatprep.subr.mxu0 0.0
    %832 = vmatpush1.msra.mxu0 0.0
    %833 = vmatprep.subr.mxu0 0.0
    %834 = vmatpush1.msra.mxu0 0.0
    %835 = vmatprep.subr.mxu0 0.0
    %836 = vmatpush1.msra.mxu0 0.0
    %837 = vmatprep.subr.mxu0 0.0
    %838 = vmatpush1.msra.mxu0 0.0
    %839 = vmatprep.subr.mxu0 0.0
    %840 = vmatpush1.msra.mxu0 0.0
    %841 = vmatprep.subr.mxu0 0.0
    %842 = vmatpush1.msra.mxu0 0.0
    %843 = vmatprep.subr.mxu0 0.0
    %844 = vmatpush1.msra.mxu0 0.0
    %845 = vmatprep.subr.mxu0 0.0
    %846 = vmatpush1.msra.mxu0 0.0
    %847 = vmatprep.subr.mxu0 0.0
    %848 = vmatpush1.msra.mxu0 0.0
    %849 = vmatprep.subr.mxu0 0.0
    %850 = vmatpush1.msra.mxu0 0.0
    %851 = vmatprep.subr.mxu0 0.0
    %852 = vmatpush1.msra.mxu0 0.0
    %853 = vmatprep.subr.mxu0 0.0
    %854 = vmatpush1.msra.mxu0 0.0
    %855 = vmatprep.subr.mxu0 0.0
    %856 = vmatpush1.msra.mxu0 0.0
    %857 = vmatprep.mubr.f32.mxu0 0.0
    %858 = vmatmul.mubr.f32.gmra.mrb[0].mxu0 %v791
    %v859 = vpop.f32.mrb[0].mxu0
    %v860 = vadd.f32 0.0, %v859
    %v861 = vpop.f32.mrb[0].mxu0
    %862 = vdwg.mxu0
    %v863 = vadd.f32 %v785, %v860
    %v864 = vsub.f32 0.0, %v863
    %v865 = vmul.f32 %v864, 1.442695
    %v866 = vpow.pop %v865
    %v867 = vadd.f32 %v866, 1.0
    %v868 = vrcp.pop %v867
    %v869 = vmul.f32 1.0, %v868
    %v870 = vadd.f32 %v860, %v284
    %872 = vrot.lane.b32.xlu0 %v870, 64
    %v873 = vpop.permute.xlu0 %872
    %v875 = vmul.f32 %v869, %v873
    %877 = vrot.lane.b32.xlu0 %v875, 64
    %v878 = vpop.permute.xlu0 %877
    %v880 = vadd.f32 %v785, %v878
    %v881 = vtanh.pop %v880
    %v882 = vsub.f32 1.0, %v869
    %884 = vrot.lane.b32.xlu0 %v881, 96
    %v885 = vpop.permute.xlu0 %884
    %v887 = vmul.f32 %v882, %v885
    %888 = vrot.lane.b32.xlu0 %v783, 32
    %v889 = vpop.permute.xlu0 %888
    %v891 = vmul.f32 %v869, %v889
    %v892 = vadd.f32 %v887, %v891
    %894 = vrot.lane.b32.xlu0 %v892, 96
    %v895 = vpop.permute.xlu0 %894
    %897 = vst.msk [vmem:[#allocation2] sm:$0xff] %vm189, %v895
    %s898 = scalar_lea.vmem [#allocation4], 40
    %899 = vst.msk [vmem:[%s898] sm:$0xff] %vm189, %v895
    %v900 = vld [vmem:[#allocation2] sm:$0xff]
    %s901 = scalar_lea.vmem [#allocation3], 48
    %v902 = vld [vmem:[%s901] sm:$0xff]
    %v903 = vld [vmem:[%s3] sm:$0xff]
    %v904 = vld [vmem:[%s3 + $0x8] sm:$0xff]
    %v905 = vld [vmem:[%s3 + $0x10] sm:$0xff]
    %v906 = vld [vmem:[%s3 + $0x18] sm:$0xff]
    %v908 = vsel %vm189, %v900, 0
    %910 = vmatprep.subr.mxu0 0.0
    %911 = vmatpush1.msra.mxu0 %v903
    %912 = vmatprep.subr.mxu0 0.0
    %913 = vmatpush1.msra.mxu0 %v904
    %914 = vmatprep.subr.mxu0 0.0
    %915 = vmatpush1.msra.mxu0 %v905
    %916 = vmatprep.subr.mxu0 0.0
    %917 = vmatpush1.msra.mxu0 %v906
    %918 = vmatprep.subr.mxu0 0.0
    %919 = vmatpush1.msra.mxu0 0.0
    %920 = vmatprep.subr.mxu0 0.0
    %921 = vmatpush1.msra.mxu0 0.0
    %922 = vmatprep.subr.mxu0 0.0
    %923 = vmatpush1.msra.mxu0 0.0
    %924 = vmatprep.subr.mxu0 0.0
    %925 = vmatpush1.msra.mxu0 0.0
    %926 = vmatprep.subr.mxu0 0.0
    %927 = vmatpush1.msra.mxu0 0.0
    %928 = vmatprep.subr.mxu0 0.0
    %929 = vmatpush1.msra.mxu0 0.0
    %930 = vmatprep.subr.mxu0 0.0
    %931 = vmatpush1.msra.mxu0 0.0
    %932 = vmatprep.subr.mxu0 0.0
    %933 = vmatpush1.msra.mxu0 0.0
    %934 = vmatprep.subr.mxu0 0.0
    %935 = vmatpush1.msra.mxu0 0.0
    %936 = vmatprep.subr.mxu0 0.0
    %937 = vmatpush1.msra.mxu0 0.0
    %938 = vmatprep.subr.mxu0 0.0
    %939 = vmatpush1.msra.mxu0 0.0
    %940 = vmatprep.subr.mxu0 0.0
    %941 = vmatpush1.msra.mxu0 0.0
    %942 = vmatprep.subr.mxu0 0.0
    %943 = vmatpush1.msra.mxu0 0.0
    %944 = vmatprep.subr.mxu0 0.0
    %945 = vmatpush1.msra.mxu0 0.0
    %946 = vmatprep.subr.mxu0 0.0
    %947 = vmatpush1.msra.mxu0 0.0
    %948 = vmatprep.subr.mxu0 0.0
    %949 = vmatpush1.msra.mxu0 0.0
    %950 = vmatprep.subr.mxu0 0.0
    %951 = vmatpush1.msra.mxu0 0.0
    %952 = vmatprep.subr.mxu0 0.0
    %953 = vmatpush1.msra.mxu0 0.0
    %954 = vmatprep.subr.mxu0 0.0
    %955 = vmatpush1.msra.mxu0 0.0
    %956 = vmatprep.subr.mxu0 0.0
    %957 = vmatpush1.msra.mxu0 0.0
    %958 = vmatprep.subr.mxu0 0.0
    %959 = vmatpush1.msra.mxu0 0.0
    %960 = vmatprep.subr.mxu0 0.0
    %961 = vmatpush1.msra.mxu0 0.0
    %962 = vmatprep.subr.mxu0 0.0
    %963 = vmatpush1.msra.mxu0 0.0
    %964 = vmatprep.subr.mxu0 0.0
    %965 = vmatpush1.msra.mxu0 0.0
    %966 = vmatprep.subr.mxu0 0.0
    %967 = vmatpush1.msra.mxu0 0.0
    %968 = vmatprep.subr.mxu0 0.0
    %969 = vmatpush1.msra.mxu0 0.0
    %970 = vmatprep.subr.mxu0 0.0
    %971 = vmatpush1.msra.mxu0 0.0
    %972 = vmatprep.subr.mxu0 0.0
    %973 = vmatpush1.msra.mxu0 0.0
    %974 = vmatprep.mubr.f32.mxu0 0.0
    %975 = vmatmul.mubr.f32.gmra.mrb[0].mxu0 %v908
    %v976 = vpop.f32.mrb[0].mxu0
    %v977 = vadd.f32 0.0, %v976
    %v978 = vpop.f32.mrb[0].mxu0
    %979 = vdwg.mxu0
    %v980 = vadd.f32 %v902, %v977
    %v981 = vsub.f32 0.0, %v980
    %v982 = vmul.f32 %v981, 1.442695
    %v983 = vpow.pop %v982
    %v984 = vadd.f32 %v983, 1.0
    %v985 = vrcp.pop %v984
    %v986 = vmul.f32 1.0, %v985
    %v987 = vadd.f32 %v977, %v284
    %989 = vrot.lane.b32.xlu0 %v987, 64
    %v990 = vpop.permute.xlu0 %989
    %v992 = vmul.f32 %v986, %v990
    %994 = vrot.lane.b32.xlu0 %v992, 64
    %v995 = vpop.permute.xlu0 %994
    %v997 = vadd.f32 %v902, %v995
    %v998 = vtanh.pop %v997
    %v999 = vsub.f32 1.0, %v986
    %1001 = vrot.lane.b32.xlu0 %v998, 96
    %v1002 = vpop.permute.xlu0 %1001
    %v1004 = vmul.f32 %v999, %v1002
    %1005 = vrot.lane.b32.xlu0 %v900, 32
    %v1006 = vpop.permute.xlu0 %1005
    %v1008 = vmul.f32 %v986, %v1006
    %v1009 = vadd.f32 %v1004, %v1008
    %1011 = vrot.lane.b32.xlu0 %v1009, 96
    %v1012 = vpop.permute.xlu0 %1011
    %1014 = vst.msk [vmem:[#allocation2] sm:$0xff] %vm189, %v1012
    %s1015 = scalar_lea.vmem [#allocation4], 48
    %1016 = vst.msk [vmem:[%s1015] sm:$0xff] %vm189, %v1012
    %v1017 = vld [vmem:[#allocation2] sm:$0xff]
    %s1018 = scalar_lea.vmem [#allocation3], 56
    %v1019 = vld [vmem:[%s1018] sm:$0xff]
    %v1020 = vld [vmem:[%s3] sm:$0xff]
    %v1021 = vld [vmem:[%s3 + $0x8] sm:$0xff]
    %v1022 = vld [vmem:[%s3 + $0x10] sm:$0xff]
    %v1023 = vld [vmem:[%s3 + $0x18] sm:$0xff]
    %v1025 = vsel %vm189, %v1017, 0
    %1027 = vmatprep.subr.mxu0 0.0
    %1028 = vmatpush1.msra.mxu0 %v1020
    %1029 = vmatprep.subr.mxu0 0.0
    %1030 = vmatpush1.msra.mxu0 %v1021
    %1031 = vmatprep.subr.mxu0 0.0
    %1032 = vmatpush1.msra.mxu0 %v1022
    %1033 = vmatprep.subr.mxu0 0.0
    %1034 = vmatpush1.msra.mxu0 %v1023
    %1035 = vmatprep.subr.mxu0 0.0
    %1036 = vmatpush1.msra.mxu0 0.0
    %1037 = vmatprep.subr.mxu0 0.0
    %1038 = vmatpush1.msra.mxu0 0.0
    %1039 = vmatprep.subr.mxu0 0.0
    %1040 = vmatpush1.msra.mxu0 0.0
    %1041 = vmatprep.subr.mxu0 0.0
    %1042 = vmatpush1.msra.mxu0 0.0
    %1043 = vmatprep.subr.mxu0 0.0
    %1044 = vmatpush1.msra.mxu0 0.0
    %1045 = vmatprep.subr.mxu0 0.0
    %1046 = vmatpush1.msra.mxu0 0.0
    %1047 = vmatprep.subr.mxu0 0.0
    %1048 = vmatpush1.msra.mxu0 0.0
    %1049 = vmatprep.subr.mxu0 0.0
    %1050 = vmatpush1.msra.mxu0 0.0
    %1051 = vmatprep.subr.mxu0 0.0
    %1052 = vmatpush1.msra.mxu0 0.0
    %1053 = vmatprep.subr.mxu0 0.0
    %1054 = vmatpush1.msra.mxu0 0.0
    %1055 = vmatprep.subr.mxu0 0.0
    %1056 = vmatpush1.msra.mxu0 0.0
    %1057 = vmatprep.subr.mxu0 0.0
    %1058 = vmatpush1.msra.mxu0 0.0
    %1059 = vmatprep.subr.mxu0 0.0
    %1060 = vmatpush1.msra.mxu0 0.0
    %1061 = vmatprep.subr.mxu0 0.0
    %1062 = vmatpush1.msra.mxu0 0.0
    %1063 = vmatprep.subr.mxu0 0.0
    %1064 = vmatpush1.msra.mxu0 0.0
    %1065 = vmatprep.subr.mxu0 0.0
    %1066 = vmatpush1.msra.mxu0 0.0
    %1067 = vmatprep.subr.mxu0 0.0
    %1068 = vmatpush1.msra.mxu0 0.0
    %1069 = vmatprep.subr.mxu0 0.0
    %1070 = vmatpush1.msra.mxu0 0.0
    %1071 = vmatprep.subr.mxu0 0.0
    %1072 = vmatpush1.msra.mxu0 0.0
    %1073 = vmatprep.subr.mxu0 0.0
    %1074 = vmatpush1.msra.mxu0 0.0
    %1075 = vmatprep.subr.mxu0 0.0
    %1076 = vmatpush1.msra.mxu0 0.0
    %1077 = vmatprep.subr.mxu0 0.0
    %1078 = vmatpush1.msra.mxu0 0.0
    %1079 = vmatprep.subr.mxu0 0.0
    %1080 = vmatpush1.msra.mxu0 0.0
    %1081 = vmatprep.subr.mxu0 0.0
    %1082 = vmatpush1.msra.mxu0 0.0
    %1083 = vmatprep.subr.mxu0 0.0
    %1084 = vmatpush1.msra.mxu0 0.0
    %1085 = vmatprep.subr.mxu0 0.0
    %1086 = vmatpush1.msra.mxu0 0.0
    %1087 = vmatprep.subr.mxu0 0.0
    %1088 = vmatpush1.msra.mxu0 0.0
    %1089 = vmatprep.subr.mxu0 0.0
    %1090 = vmatpush1.msra.mxu0 0.0
    %1091 = vmatprep.mubr.f32.mxu0 0.0
    %1092 = vmatmul.mubr.f32.gmra.mrb[0].mxu0 %v1025
    %v1093 = vpop.f32.mrb[0].mxu0
    %v1094 = vadd.f32 0.0, %v1093
    %v1095 = vpop.f32.mrb[0].mxu0
    %1096 = vdwg.mxu0
    %v1097 = vadd.f32 %v1019, %v1094
    %v1098 = vsub.f32 0.0, %v1097
    %v1099 = vmul.f32 %v1098, 1.442695
    %v1100 = vpow.pop %v1099
    %v1101 = vadd.f32 %v1100, 1.0
    %v1102 = vrcp.pop %v1101
    %v1103 = vmul.f32 1.0, %v1102
    %v1104 = vadd.f32 %v1094, %v284
    %1106 = vrot.lane.b32.xlu0 %v1104, 64
    %v1107 = vpop.permute.xlu0 %1106
    %v1109 = vmul.f32 %v1103, %v1107
    %1111 = vrot.lane.b32.xlu0 %v1109, 64
    %v1112 = vpop.permute.xlu0 %1111
    %v1114 = vadd.f32 %v1019, %v1112
    %v1115 = vtanh.pop %v1114
    %v1116 = vsub.f32 1.0, %v1103
    %1118 = vrot.lane.b32.xlu0 %v1115, 96
    %v1119 = vpop.permute.xlu0 %1118
    %v1121 = vmul.f32 %v1116, %v1119
    %1122 = vrot.lane.b32.xlu0 %v1017, 32
    %v1123 = vpop.permute.xlu0 %1122
    %v1125 = vmul.f32 %v1103, %v1123
    %v1126 = vadd.f32 %v1121, %v1125
    %1128 = vrot.lane.b32.xlu0 %v1126, 96
    %v1129 = vpop.permute.xlu0 %1128
    %1131 = vst.msk [vmem:[#allocation2] sm:$0xff] %vm189, %v1129
    %s1132 = scalar_lea.vmem [#allocation4], 56
    %1133 = vst.msk [vmem:[%s1132] sm:$0xff] %vm189, %v1129
    %v1134 = vld [vmem:[#allocation2] sm:$0xff]
    %1135 = vst.msk [vmem:[#allocation5] sm:$0xff] %vm189, %v1134
    %v1136 = vld [vmem:[#allocation4] sm:$0xff]
    %v1137 = vld [vmem:[#allocation4 + $0x8] sm:$0xff]
    %v1138 = vld [vmem:[#allocation4 + $0x10] sm:$0xff]
    %v1139 = vld [vmem:[#allocation4 + $0x18] sm:$0xff]
    %v1140 = vld [vmem:[#allocation4 + $0x20] sm:$0xff]
    %v1141 = vld [vmem:[#allocation4 + $0x28] sm:$0xff]
    %v1142 = vld [vmem:[#allocation4 + $0x30] sm:$0xff]
    %v1143 = vld [vmem:[#allocation4 + $0x38] sm:$0xff]
    %v1144 = vld [vmem:[%s6] sm:$0xff]
    %v1145 = vld [vmem:[%s6 + $0x8] sm:$0xff]
    %v1146 = vld [vmem:[%s6 + $0x10] sm:$0xff]
    %v1147 = vld [vmem:[%s6 + $0x18] sm:$0xff]
    %v1148 = vld [vmem:[%s7] sm:$0x1]
    %v1150 = vlaneseq
    %v1151 = vshrl.u32 %v1150, 7
    %v1152 = vsub.s32 0, %v1151
    %v1153 = vrot.slane %v1148, %v1152
    %v1156 = vsel %vm189, %v1136, 0
    %v1159 = vsel %vm189, %v1137, 0
    %v1162 = vsel %vm189, %v1138, 0
    %v1165 = vsel %vm189, %v1139, 0
    %v1168 = vsel %vm189, %v1140, 0
    %v1171 = vsel %vm189, %v1141, 0
    %v1174 = vsel %vm189, %v1142, 0
    %v1177 = vsel %vm189, %v1143, 0
    %1179 = vmatprep.subr.mxu0 0.0
    %1180 = vmatpush1.msra.mxu0 %v1144
    %1181 = vmatprep.subr.mxu0 0.0
    %1182 = vmatpush1.msra.mxu0 %v1145
    %1183 = vmatprep.subr.mxu0 0.0
    %1184 = vmatpush1.msra.mxu0 %v1146
    %1185 = vmatprep.subr.mxu0 0.0
    %1186 = vmatpush1.msra.mxu0 %v1147
    %1187 = vmatprep.subr.mxu0 0.0
    %1188 = vmatpush1.msra.mxu0 0.0
    %1189 = vmatprep.subr.mxu0 0.0
    %1190 = vmatpush1.msra.mxu0 0.0
    %1191 = vmatprep.subr.mxu0 0.0
    %1192 = vmatpush1.msra.mxu0 0.0
    %1193 = vmatprep.subr.mxu0 0.0
    %1194 = vmatpush1.msra.mxu0 0.0
    %1195 = vmatprep.subr.mxu0 0.0
    %1196 = vmatpush1.msra.mxu0 0.0
    %1197 = vmatprep.subr.mxu0 0.0
    %1198 = vmatpush1.msra.mxu0 0.0
    %1199 = vmatprep.subr.mxu0 0.0
    %1200 = vmatpush1.msra.mxu0 0.0
    %1201 = vmatprep.subr.mxu0 0.0
    %1202 = vmatpush1.msra.mxu0 0.0
    %1203 = vmatprep.subr.mxu0 0.0
    %1204 = vmatpush1.msra.mxu0 0.0
    %1205 = vmatprep.subr.mxu0 0.0
    %1206 = vmatpush1.msra.mxu0 0.0
    %1207 = vmatprep.subr.mxu0 0.0
    %1208 = vmatpush1.msra.mxu0 0.0
    %1209 = vmatprep.subr.mxu0 0.0
    %1210 = vmatpush1.msra.mxu0 0.0
    %1211 = vmatprep.subr.mxu0 0.0
    %1212 = vmatpush1.msra.mxu0 0.0
    %1213 = vmatprep.subr.mxu0 0.0
    %1214 = vmatpush1.msra.mxu0 0.0
    %1215 = vmatprep.subr.mxu0 0.0
    %1216 = vmatpush1.msra.mxu0 0.0
    %1217 = vmatprep.subr.mxu0 0.0
    %1218 = vmatpush1.msra.mxu0 0.0
    %1219 = vmatprep.subr.mxu0 0.0
    %1220 = vmatpush1.msra.mxu0 0.0
    %1221 = vmatprep.subr.mxu0 0.0
    %1222 = vmatpush1.msra.mxu0 0.0
    %1223 = vmatprep.subr.mxu0 0.0
    %1224 = vmatpush1.msra.mxu0 0.0
    %1225 = vmatprep.subr.mxu0 0.0
    %1226 = vmatpush1.msra.mxu0 0.0
    %1227 = vmatprep.subr.mxu0 0.0
    %1228 = vmatpush1.msra.mxu0 0.0
    %1229 = vmatprep.subr.mxu0 0.0
    %1230 = vmatpush1.msra.mxu0 0.0
    %1231 = vmatprep.subr.mxu0 0.0
    %1232 = vmatpush1.msra.mxu0 0.0
    %1233 = vmatprep.subr.mxu0 0.0
    %1234 = vmatpush1.msra.mxu0 0.0
    %1235 = vmatprep.subr.mxu0 0.0
    %1236 = vmatpush1.msra.mxu0 0.0
    %1237 = vmatprep.subr.mxu0 0.0
    %1238 = vmatpush1.msra.mxu0 0.0
    %1239 = vmatprep.subr.mxu0 0.0
    %1240 = vmatpush1.msra.mxu0 0.0
    %1241 = vmatprep.subr.mxu0 0.0
    %1242 = vmatpush1.msra.mxu0 0.0
    %1243 = vmatprep.mubr.f32.mxu0 0.0
    %1244 = vmatmul.mubr.f32.gmra.mrb[0].mxu0 %v1156
    %v1245 = vpop.f32.mrb[0].mxu0
    %v1246 = vadd.f32 %v1153, %v1245
    %v1247 = vpop.f32.mrb[0].mxu0
    %1248 = vmatprep.mubr.f32.mxu0 0.0
    %1249 = vmatmul.mubr.f32.gmra.mrb[0].mxu0 %v1159
    %v1250 = vpop.f32.mrb[0].mxu0
    %v1251 = vadd.f32 %v1153, %v1250
    %v1252 = vpop.f32.mrb[0].mxu0
    %1253 = vmatprep.mubr.f32.mxu0 0.0
    %1254 = vmatmul.mubr.f32.gmra.mrb[0].mxu0 %v1162
    %v1255 = vpop.f32.mrb[0].mxu0
    %v1256 = vadd.f32 %v1153, %v1255
    %v1257 = vpop.f32.mrb[0].mxu0
    %1258 = vmatprep.mubr.f32.mxu0 0.0
    %1259 = vmatmul.mubr.f32.gmra.mrb[0].mxu0 %v1165
    %v1260 = vpop.f32.mrb[0].mxu0
    %v1261 = vadd.f32 %v1153, %v1260
    %v1262 = vpop.f32.mrb[0].mxu0
    %1263 = vmatprep.mubr.f32.mxu0 0.0
    %1264 = vmatmul.mubr.f32.gmra.mrb[0].mxu0 %v1168
    %v1265 = vpop.f32.mrb[0].mxu0
    %v1266 = vadd.f32 %v1153, %v1265
    %v1267 = vpop.f32.mrb[0].mxu0
    %1268 = vmatprep.mubr.f32.mxu0 0.0
    %1269 = vmatmul.mubr.f32.gmra.mrb[0].mxu0 %v1171
    %v1270 = vpop.f32.mrb[0].mxu0
    %v1271 = vadd.f32 %v1153, %v1270
    %v1272 = vpop.f32.mrb[0].mxu0
    %1273 = vmatprep.mubr.f32.mxu0 0.0
    %1274 = vmatmul.mubr.f32.gmra.mrb[0].mxu0 %v1174
    %v1275 = vpop.f32.mrb[0].mxu0
    %v1276 = vadd.f32 %v1153, %v1275
    %v1277 = vpop.f32.mrb[0].mxu0
    %1278 = vmatprep.mubr.f32.mxu0 0.0
    %1279 = vmatmul.mubr.f32.gmra.mrb[0].mxu0 %v1177
    %v1280 = vpop.f32.mrb[0].mxu0
    %v1281 = vadd.f32 %v1153, %v1280
    %v1282 = vpop.f32.mrb[0].mxu0
    %1283 = vdwg.mxu0
    %vm1284 = vcmask 64512
    %v1285 = vsel %vm1284, %v1246, -inf
    %1286 = vmax.xlane.f32.xlu0 %v1285
    %v1287 = vpop.xlane.xlu0 %1286
    %v1288 = vsel %vm1284, %v1251, -inf
    %1289 = vmax.xlane.f32.xlu0 %v1288
    %v1290 = vpop.xlane.xlu0 %1289
    %v1291 = vsel %vm1284, %v1256, -inf
    %1292 = vmax.xlane.f32.xlu0 %v1291
    %v1293 = vpop.xlane.xlu0 %1292
    %v1294 = vsel %vm1284, %v1261, -inf
    %1295 = vmax.xlane.f32.xlu0 %v1294
    %v1296 = vpop.xlane.xlu0 %1295
    %v1297 = vsel %vm1284, %v1266, -inf
    %1298 = vmax.xlane.f32.xlu0 %v1297
    %v1299 = vpop.xlane.xlu0 %1298
    %v1300 = vsel %vm1284, %v1271, -inf
    %1301 = vmax.xlane.f32.xlu0 %v1300
    %v1302 = vpop.xlane.xlu0 %1301
    %v1303 = vsel %vm1284, %v1276, -inf
    %1304 = vmax.xlane.f32.xlu0 %v1303
    %v1305 = vpop.xlane.xlu0 %1304
    %v1306 = vsel %vm1284, %v1281, -inf
    %1307 = vmax.xlane.f32.xlu0 %v1306
    %v1308 = vpop.xlane.xlu0 %1307
    %v1309 = vsub.f32 %v1246, %v1287
    %v1310 = vsub.f32 %v1251, %v1290
    %v1311 = vsub.f32 %v1256, %v1293
    %v1312 = vsub.f32 %v1261, %v1296
    %v1313 = vsub.f32 %v1266, %v1299
    %v1314 = vsub.f32 %v1271, %v1302
    %v1315 = vsub.f32 %v1276, %v1305
    %v1316 = vsub.f32 %v1281, %v1308
    %v1317 = vmul.f32 %v1309, 1.442695
    %v1318 = vpow.pop %v1317
    %v1319 = vmul.f32 %v1310, 1.442695
    %v1320 = vpow.pop %v1319
    %v1321 = vmul.f32 %v1311, 1.442695
    %v1322 = vpow.pop %v1321
    %v1323 = vmul.f32 %v1312, 1.442695
    %v1324 = vpow.pop %v1323
    %v1325 = vmul.f32 %v1313, 1.442695
    %v1326 = vpow.pop %v1325
    %v1327 = vmul.f32 %v1314, 1.442695
    %v1328 = vpow.pop %v1327
    %v1329 = vmul.f32 %v1315, 1.442695
    %v1330 = vpow.pop %v1329
    %v1331 = vmul.f32 %v1316, 1.442695
    %v1332 = vpow.pop %v1331
    %v1333 = vsel %vm1284, %v1318, 0.0
    %1334 = vadd.xlane.f32.xlu0 %v1333
    %v1335 = vpop.xlane.xlu0 %1334
    %v1336 = vsel %vm1284, %v1320, 0.0
    %1337 = vadd.xlane.f32.xlu0 %v1336
    %v1338 = vpop.xlane.xlu0 %1337
    %v1339 = vsel %vm1284, %v1322, 0.0
    %1340 = vadd.xlane.f32.xlu0 %v1339
    %v1341 = vpop.xlane.xlu0 %1340
    %v1342 = vsel %vm1284, %v1324, 0.0
    %1343 = vadd.xlane.f32.xlu0 %v1342
    %v1344 = vpop.xlane.xlu0 %1343
    %v1345 = vsel %vm1284, %v1326, 0.0
    %1346 = vadd.xlane.f32.xlu0 %v1345
    %v1347 = vpop.xlane.xlu0 %1346
    %v1348 = vsel %vm1284, %v1328, 0.0
    %1349 = vadd.xlane.f32.xlu0 %v1348
    %v1350 = vpop.xlane.xlu0 %1349
    %v1351 = vsel %vm1284, %v1330, 0.0
    %1352 = vadd.xlane.f32.xlu0 %v1351
    %v1353 = vpop.xlane.xlu0 %1352
    %v1354 = vsel %vm1284, %v1332, 0.0
    %1355 = vadd.xlane.f32.xlu0 %v1354
    %v1356 = vpop.xlane.xlu0 %1355
    %v1357 = vlog2.pop %v1335
    %v1358 = vmul.f32 %v1357, 0.6931472
    %v1359 = vlog2.pop %v1338
    %v1360 = vmul.f32 %v1359, 0.6931472
    %v1361 = vlog2.pop %v1341
    %v1362 = vmul.f32 %v1361, 0.6931472
    %v1363 = vlog2.pop %v1344
    %v1364 = vmul.f32 %v1363, 0.6931472
    %v1365 = vlog2.pop %v1347
    %v1366 = vmul.f32 %v1365, 0.6931472
    %v1367 = vlog2.pop %v1350
    %v1368 = vmul.f32 %v1367, 0.6931472
    %v1369 = vlog2.pop %v1353
    %v1370 = vmul.f32 %v1369, 0.6931472
    %v1371 = vlog2.pop %v1356
    %v1372 = vmul.f32 %v1371, 0.6931472
    %v1373 = vsub.f32 %v1309, %v1358
    %v1374 = vsub.f32 %v1310, %v1360
    %v1375 = vsub.f32 %v1311, %v1362
    %v1376 = vsub.f32 %v1312, %v1364
    %v1377 = vsub.f32 %v1313, %v1366
    %v1378 = vsub.f32 %v1314, %v1368
    %v1379 = vsub.f32 %v1315, %v1370
    %v1380 = vsub.f32 %v1316, %v1372
    %1381 = vst.msk [vmem:[%s8] sm:$0xff] %vm1284, %v1373
    %1382 = vst.msk [vmem:[%s8 + $0x8] sm:$0xff] %vm1284, %v1374
    %1383 = vst.msk [vmem:[%s8 + $0x10] sm:$0xff] %vm1284, %v1375
    %1384 = vst.msk [vmem:[%s8 + $0x18] sm:$0xff] %vm1284, %v1376
    %1385 = vst.msk [vmem:[%s8 + $0x20] sm:$0xff] %vm1284, %v1377
    %1386 = vst.msk [vmem:[%s8 + $0x28] sm:$0xff] %vm1284, %v1378
    %1387 = vst.msk [vmem:[%s8 + $0x30] sm:$0xff] %vm1284, %v1379
    %1388 = vst.msk [vmem:[%s8 + $0x38] sm:$0xff] %vm1284, %v1380
    // Predicated region
    $region34: #{tpu_custom_call.1} parent=1 // pred_check
      _
    $region35: #{tpu_custom_call.1} parent=1 // pred_check_branch
      %1390 = sbr.rel (0) target = $region37
    $region36: #{tpu_custom_call.1} parent=1 // pred_region
      _
    $region37: #{tpu_custom_call.1} parent=1 // pred_fallthru
      _
    // Predicated region
    $region38: #{tpu_custom_call.1} parent=1 // pred_check
      _
    $region39: #{tpu_custom_call.1} parent=1 // pred_check_branch
      %1392 = sbr.rel (0) target = $region41
    $region40: #{tpu_custom_call.1} parent=1 // pred_region
      %s1394 = ssub.s32 128, 128
      %1395 = vsyncadd [#allocation6], %s1394
      %s1397 = sshll.u32 [#allocation5], 4
      %s1398 = int_to_ptr.vmem [resolvable:$true] %s1397
      %1400 = dma.vmem_to_hbm [thread:$0]  %s1398, 128, %s9, [#allocation6]
    $region41: #{tpu_custom_call.1} parent=1 // pred_fallthru
      _
    // Predicated region
    $region42: #{tpu_custom_call.1} parent=1 // pred_check
      _
    $region43: #{tpu_custom_call.1} parent=1 // pred_check_branch
      %1402 = sbr.rel (0) target = $region45
    $region44: #{tpu_custom_call.1} parent=1 // pred_region
      _
    $region45: #{tpu_custom_call.1} parent=1 // pred_fallthru
      _
    // Predicated region
    $region46: #{tpu_custom_call.1} parent=1 // pred_check
      _
    $region47: #{tpu_custom_call.1} parent=1 // pred_check_branch
      %1404 = sbr.rel (0) target = $region49
    $region48: #{tpu_custom_call.1} parent=1 // pred_region
      %1405 = dma.done [#allocation6], 128
    $region49: #{tpu_custom_call.1} parent=1 // pred_fallthru
      _
    %1406 = vsyncpa [#allocation6], 1

</llo_original>
